<compile_context>
chip_gen: v7x
topology: tpu7x:2x2x1
jax: 0.10.0
libtpu: 0.0.40
codegen_flags: <defaults>
</compile_context>

<pallas_src>
import functools

import numpy as np
import jax
import jax.numpy as jnp
from jax.experimental import pallas as pl
from jax.experimental.pallas import tpu as pltpu


# -----------------------------------------------------------------------------
# In-kernel helpers
# -----------------------------------------------------------------------------
def _mm(a, b):
    """bf16 MXU matmul with f32 accumulation (bf16->bf16 cast is a no-op)."""
    return jnp.dot(a.astype(jnp.bfloat16), b.astype(jnp.bfloat16),
                   preferred_element_type=jnp.float32)


def _pad_t(x_bf16, p):
    """Zero-pad the time (lane) axis by p on both sides (input already bf16)."""
    z = jnp.zeros((x_bf16.shape[0], p), jnp.bfloat16)
    return jnp.concatenate([z, x_bf16, z], axis=1)


def _im2col(xp, pad, dilation, T):
    """Build the (3*C_in, T) im2col slab of a pre-padded (C_in, T+2*pad) input."""
    return jnp.concatenate(
        [xp[:, pad + (k - 1) * dilation: pad + (k - 1) * dilation + T]
         for k in range(3)], axis=0)


def _conv3(xp, pad, w, b, dilation):
    """'same' K=3 dilated conv as ONE im2col MXU matmul. Returns f32 pre-act."""
    T = xp.shape[1] - 2 * pad
    return _mm(w, _im2col(xp, pad, dilation, T)) + b


# -----------------------------------------------------------------------------
# Fused DCAN forward kernel (one grid step == one batch element)
# -----------------------------------------------------------------------------
def _dcan_kernel(x_ref, wg_ref, bg_ref, wgpm_ref, bgpm_ref, wb1_ref, bb1_ref,
                 wm24_ref, bm24_ref, wt1_ref, bt1_ref, wht_ref, bht_ref,
                 whb_ref, bhb_ref, wc2_ref, bc2_ref, wc3_ref, bc3_ref,
                 mask_ref, heads_ref, prop_ref):
    f32, bf16 = jnp.float32, jnp.bfloat16
    Ct = wg_ref.shape[0]
    T = x_ref.shape[2]
    M = mask_ref.shape[1]

    x = x_ref[0].astype(bf16)                               # (feat_dim, T)

    # ---- gcn: Conv1d(k=1) + ReLU ----
    h = jnp.maximum(_mm(wg_ref[...], x) + bg_ref[...], 0.0).astype(bf16)  # (Ct, T)

    # ---- GPM(arch=(2, 4)): residual dilated blocks ----
    for i, dil in enumerate((2, 4)):
        hp = _pad_t(h, dil)
        h = jnp.maximum(h.astype(f32)
                        + _conv3(hp, dil, wgpm_ref[i], bgpm_ref[i], dil),
                        0.0).astype(bf16)
    base = h                                                # (Ct, T) bf16
    base_p = _pad_t(base, 4)        # shared padded slab for all downstream convs

    # ---- all four dilation-1 convs on base as ONE stacked matmul ----
    # rows: [0:Ct]=LPP-start, [Ct:2Ct]=LPP-end, [2Ct:3Ct]=MTCA dil-1, [3Ct:]=CFM c1
    slab1 = _im2col(base_p, 4, 1, T)                        # (3*Ct, T)  built once
    base1 = _mm(wb1_ref[...], slab1) + bb1_ref[...]         # (4*Ct, T) f32

    se = jnp.maximum(base1[0:2 * Ct], 0.0).astype(bf16)     # [s; e]  (LPP layer-1)
    mtca1 = base1[2 * Ct:3 * Ct]                            # pre-act (residual branch)
    pf = jnp.maximum(base1[3 * Ct:4 * Ct], 0.0).astype(bf16)  # CFM layer-1

    # ---- MTCA: three dilated branches, residual, single ReLU ----
    acc = base.astype(f32) + mtca1
    acc = acc + _conv3(base_p, 4, wm24_ref[0], bm24_ref[0], 2)
    acc = acc + _conv3(base_p, 4, wm24_ref[1], bm24_ref[1], 4)
    tfeat = jnp.maximum(acc, 0.0).astype(bf16)              # (Ct, T)
    tfeat_p = _pad_t(tfeat, 1)

    # ---- start / end prediction first layers as ONE stacked matmul ----
    slab_t = _im2col(tfeat_p, 1, 1, T)                      # (3*Ct, T)
    se1 = jnp.maximum(_mm(wt1_ref[...], slab_t) + bt1_ref[...],
                      0.0).astype(bf16)                     # [s1; e1] (2*Ct, T)

    # ---- sigmoid heads: two block-diagonal (2, 2*Ct) matmuls, no big concat ----
    heads_t = jax.nn.sigmoid(_mm(wht_ref[...], se1) + bht_ref[...])  # [start, end]
    heads_b = jax.nn.sigmoid(_mm(whb_ref[...], se) + bhb_ref[...])   # [start_l, end_l]
    heads_ref[0] = jnp.concatenate([heads_t, heads_b],
                                   axis=0).astype(heads_ref.dtype)   # (4, T)

    # ---- CFM (reassociated) ----
    # relu(Wc2 @ (pf @ mask) + b) == relu((Wc2 @ pf) @ mask + b)
    q = _mm(wc2_ref[...], pf).astype(bf16)                  # (Ct, T)
    CH = 2048                                               # lane-dense chunks of D*T
    for start in range(0, M, CH):
        ch = min(CH, M - start)
        mcol = mask_ref[:, start:start + ch]                # (T, ch) bf16
        h2 = jnp.maximum(_mm(q, mcol) + bc2_ref[...], 0.0)  # (Ct, ch)
        prop_c = jax.nn.sigmoid(_mm(wc3_ref[...], h2) + bc3_ref[...])  # (2, ch)
        prop_ref[0, :, start:start + ch] = prop_c.astype(prop_ref.dtype)


# -----------------------------------------------------------------------------
# Parameter construction (deterministic, synthetic, packed for the fused kernel)
# -----------------------------------------------------------------------------
def build_bm_mask(T, D):
    """BMN-style average-sampling mask (built in f32, stored bf16 for the MXU)."""
    mask = np.zeros((T, D * T), np.float32)
    for d in range(D):
        for t in range(T):
            if t + d < T:
                mask[t:t + d + 1, d * T + t] = 1.0 / (d + 1)
    return jnp.asarray(mask, jnp.bfloat16)


def init_dcan_params(key, feat_dim, temporal_dim, temporal_scale, scale=0.1):
    Ct, T = temporal_dim, temporal_scale
    keys = iter(jax.random.split(key, 64))

    def w(shape):
        return (jax.random.normal(next(keys), shape, jnp.float32) * scale
                ).astype(jnp.bfloat16)

    def b(shape):
        return jax.random.normal(next(keys), shape, jnp.float32) * scale

    def head_pair():
        m = np.zeros((2, 2 * Ct), np.float32)
        for i in range(2):
            m[i, i * Ct:(i + 1) * Ct] = np.asarray(
                jax.random.normal(next(keys), (Ct,), jnp.float32) * scale)
        return jnp.asarray(m, jnp.bfloat16)

    p = {}
    # gcn: Conv1d(feat_dim, Ct, k=1)
    p["w_gcn"] = w((Ct, feat_dim))
    p["b_gcn"] = b((Ct, 1))
    # GPM residual blocks (dil 2, 4): K=3 taps packed along contraction axis
    p["w_gpm"] = w((2, Ct, 3 * Ct))
    p["b_gpm"] = b((2, Ct, 1))
    # stacked dilation-1 convs on base: [LPP-start, LPP-end, MTCA-dil1, CFM-c1]
    p["w_base1"] = w((4 * Ct, 3 * Ct))
    p["b_base1"] = b((4 * Ct, 1))
    # MTCA dil-2 / dil-4 branches
    p["w_mtca24"] = w((2, Ct, 3 * Ct))
    p["b_mtca24"] = b((2, Ct, 1))
    # stacked start_pred / end_pred first layers (dil 1 on MTCA output)
    p["w_tfeat1"] = w((2 * Ct, 3 * Ct))
    p["b_tfeat1"] = b((2 * Ct, 1))
    # sigmoid heads: block-diagonal pairs
    p["w_head_t"] = head_pair()          # rows: [start, end]      (from s1, e1)
    p["b_head_t"] = b((2, 1))
    p["w_head_b"] = head_pair()          # rows: [start_l, end_l]  (from s, e)
    p["b_head_b"] = b((2, 1))
    # CFM: 1x1 channel mix + 2-channel sigmoid head over the D*T proposal axis
    p["w_cfm2"] = w((Ct, Ct))
    p["b_cfm2"] = b((Ct, 1))
    p["w_cfm3"] = w((2, Ct))
    p["b_cfm3"] = b((2, 1))
    p["bm_mask"] = build_bm_mask(T, T)
    return p


# -----------------------------------------------------------------------------
# DCAN forward (single fused pallas_call)
# -----------------------------------------------------------------------------
def dcan_forward(params, x, temporal_scale):
    B, feat_dim, T = x.shape
    D = temporal_scale
    M = D * T
    Ct = params["w_gcn"].shape[0]

    heads, prop = pl.pallas_call(
        _dcan_kernel,
        out_shape=(jax.ShapeDtypeStruct((B, 4, T), jnp.float32),
                   jax.ShapeDtypeStruct((B, 2, M), jnp.float32)),
        grid=(B,),
        in_specs=[
            pl.BlockSpec((1, feat_dim, T), lambda b: (b, 0, 0)),
            pl.BlockSpec((Ct, feat_dim), lambda b: (0, 0)),
            pl.BlockSpec((Ct, 1), lambda b: (0, 0)),
            pl.BlockSpec((2, Ct, 3 * Ct), lambda b: (0, 0, 0)),
            pl.BlockSpec((2, Ct, 1), lambda b: (0, 0, 0)),
            pl.BlockSpec((4 * Ct, 3 * Ct), lambda b: (0, 0)),
            pl.BlockSpec((4 * Ct, 1), lambda b: (0, 0)),
            pl.BlockSpec((2, Ct, 3 * Ct), lambda b: (0, 0, 0)),
            pl.BlockSpec((2, Ct, 1), lambda b: (0, 0, 0)),
            pl.BlockSpec((2 * Ct, 3 * Ct), lambda b: (0, 0)),
            pl.BlockSpec((2 * Ct, 1), lambda b: (0, 0)),
            pl.BlockSpec((2, 2 * Ct), lambda b: (0, 0)),
            pl.BlockSpec((2, 1), lambda b: (0, 0)),
            pl.BlockSpec((2, 2 * Ct), lambda b: (0, 0)),
            pl.BlockSpec((2, 1), lambda b: (0, 0)),
            pl.BlockSpec((Ct, Ct), lambda b: (0, 0)),
            pl.BlockSpec((Ct, 1), lambda b: (0, 0)),
            pl.BlockSpec((2, Ct), lambda b: (0, 0)),
            pl.BlockSpec((2, 1), lambda b: (0, 0)),
            pl.BlockSpec((T, M), lambda b: (0, 0)),
        ],
        out_specs=(
            pl.BlockSpec((1, 4, T), lambda b: (b, 0, 0)),
            pl.BlockSpec((1, 2, M), lambda b: (b, 0, 0)),
        ),
        compiler_params=pltpu.CompilerParams(
            dimension_semantics=("parallel",),
            vmem_limit_bytes=48 * 1024 * 1024),
    )(x, params["w_gcn"], params["b_gcn"], params["w_gpm"], params["b_gpm"],
      params["w_base1"], params["b_base1"], params["w_mtca24"],
      params["b_mtca24"], params["w_tfeat1"], params["b_tfeat1"],
      params["w_head_t"], params["b_head_t"], params["w_head_b"],
      params["b_head_b"], params["w_cfm2"], params["b_cfm2"],
      params["w_cfm3"], params["b_cfm3"], params["bm_mask"])

    proposal = prop.reshape(B, 2, D, T)
    # heads rows: [start, end, start_l, end_l]
    start = jnp.stack([heads[:, 0], heads[:, 2]], axis=1)[:, :, None, :]
    end = jnp.stack([heads[:, 1], heads[:, 3]], axis=1)[:, :, None, :]
    return proposal, start, end


# -----------------------------------------------------------------------------
# main
# -----------------------------------------------------------------------------
if __name__ == "__main__":
    # small synthetic config
    batch = 2
    feat_dim = 16
    temporal_dim = 32
    temporal_scale = 16

    key = jax.random.PRNGKey(0)
    k_params, k_x = jax.random.split(key)
    params = init_dcan_params(k_params, feat_dim, temporal_dim, temporal_scale)
    x = jax.random.normal(k_x, (batch, feat_dim, temporal_scale), jnp.float32)

    fwd = jax.jit(functools.partial(dcan_forward, temporal_scale=temporal_scale))
    proposal, start, end = fwd(params, x)
    jax.block_until_ready((proposal, start, end))

    assert proposal.shape == (batch, 2, temporal_scale, temporal_scale)
    assert start.shape == (batch, 2, 1, temporal_scale)
    assert end.shape == (batch, 2, 1, temporal_scale)
    # sigmoid outputs must lie in [0, 1]
    assert bool(jnp.all((proposal >= 0.0) & (proposal <= 1.0)))
    assert bool(jnp.all((start >= 0.0) & (start <= 1.0)))
    assert bool(jnp.all((end >= 0.0) & (end <= 1.0)))
    assert bool(jnp.all(jnp.isfinite(proposal)))
    print("KERNEL_OK")
</pallas_src>

<mosaic_0001>
module attributes {stable_mosaic.version = 11 : i64} {
  func.func @_dcan_kernel(%arg0: i32, %arg1: memref<1x16x16xf32, #tpu.memory_space<vmem>>, %arg2: memref<32x16xbf16, #tpu.memory_space<vmem>>, %arg3: memref<32x1xf32, #tpu.memory_space<vmem>>, %arg4: memref<2x32x96xbf16, #tpu.memory_space<vmem>>, %arg5: memref<2x32x1xf32, #tpu.memory_space<vmem>>, %arg6: memref<128x96xbf16, #tpu.memory_space<vmem>>, %arg7: memref<128x1xf32, #tpu.memory_space<vmem>>, %arg8: memref<2x32x96xbf16, #tpu.memory_space<vmem>>, %arg9: memref<2x32x1xf32, #tpu.memory_space<vmem>>, %arg10: memref<64x96xbf16, #tpu.memory_space<vmem>>, %arg11: memref<64x1xf32, #tpu.memory_space<vmem>>, %arg12: memref<2x64xbf16, #tpu.memory_space<vmem>>, %arg13: memref<2x1xf32, #tpu.memory_space<vmem>>, %arg14: memref<2x64xbf16, #tpu.memory_space<vmem>>, %arg15: memref<2x1xf32, #tpu.memory_space<vmem>>, %arg16: memref<32x32xbf16, #tpu.memory_space<vmem>>, %arg17: memref<32x1xf32, #tpu.memory_space<vmem>>, %arg18: memref<2x32xbf16, #tpu.memory_space<vmem>>, %arg19: memref<2x1xf32, #tpu.memory_space<vmem>>, %arg20: memref<16x256xbf16, #tpu.memory_space<vmem>>, %arg21: memref<1x4x16xf32, #tpu.memory_space<vmem>>, %arg22: memref<1x2x256xf32, #tpu.memory_space<vmem>>) attributes {dimension_semantics = [#tpu.dimension_semantics<parallel>], iteration_bounds = array<i64: 2>, scalar_prefetch = 0 : i64, scratch_operands = 0 : i64, tpu.core_type = #tpu.core_type<tc>, window_params = [{transform_indices = @transform_0, window_bounds = array<i64: 1, 16, 16>}, {pipeline_mode = #tpu.pipeline_mode<synchronous>, transform_indices = @transform_1, window_bounds = array<i64: 32, 16>}, {pipeline_mode = #tpu.pipeline_mode<synchronous>, transform_indices = @transform_2, window_bounds = array<i64: 32, 1>}, {pipeline_mode = #tpu.pipeline_mode<synchronous>, transform_indices = @transform_3, window_bounds = array<i64: 2, 32, 96>}, {pipeline_mode = #tpu.pipeline_mode<synchronous>, transform_indices = @transform_4, window_bounds = array<i64: 2, 32, 1>}, {pipeline_mode = #tpu.pipeline_mode<synchronous>, transform_indices = @transform_5, window_bounds = array<i64: 128, 96>}, {pipeline_mode = #tpu.pipeline_mode<synchronous>, transform_indices = @transform_6, window_bounds = array<i64: 128, 1>}, {pipeline_mode = #tpu.pipeline_mode<synchronous>, transform_indices = @transform_7, window_bounds = array<i64: 2, 32, 96>}, {pipeline_mode = #tpu.pipeline_mode<synchronous>, transform_indices = @transform_8, window_bounds = array<i64: 2, 32, 1>}, {pipeline_mode = #tpu.pipeline_mode<synchronous>, transform_indices = @transform_9, window_bounds = array<i64: 64, 96>}, {pipeline_mode = #tpu.pipeline_mode<synchronous>, transform_indices = @transform_10, window_bounds = array<i64: 64, 1>}, {pipeline_mode = #tpu.pipeline_mode<synchronous>, transform_indices = @transform_11, window_bounds = array<i64: 2, 64>}, {pipeline_mode = #tpu.pipeline_mode<synchronous>, transform_indices = @transform_12, window_bounds = array<i64: 2, 1>}, {pipeline_mode = #tpu.pipeline_mode<synchronous>, transform_indices = @transform_13, window_bounds = array<i64: 2, 64>}, {pipeline_mode = #tpu.pipeline_mode<synchronous>, transform_indices = @transform_14, window_bounds = array<i64: 2, 1>}, {pipeline_mode = #tpu.pipeline_mode<synchronous>, transform_indices = @transform_15, window_bounds = array<i64: 32, 32>}, {pipeline_mode = #tpu.pipeline_mode<synchronous>, transform_indices = @transform_16, window_bounds = array<i64: 32, 1>}, {pipeline_mode = #tpu.pipeline_mode<synchronous>, transform_indices = @transform_17, window_bounds = array<i64: 2, 32>}, {pipeline_mode = #tpu.pipeline_mode<synchronous>, transform_indices = @transform_18, window_bounds = array<i64: 2, 1>}, {pipeline_mode = #tpu.pipeline_mode<synchronous>, transform_indices = @transform_19, window_bounds = array<i64: 16, 256>}, {transform_indices = @transform_20, window_bounds = array<i64: 1, 4, 16>}, {transform_indices = @transform_21, window_bounds = array<i64: 1, 2, 256>}]} {
    %c0 = arith.constant 0 : index
    %c0_0 = arith.constant 0 : index
    %c0_1 = arith.constant 0 : index
    %0 = vector.load %arg1[%c0, %c0_0, %c0_1] : memref<1x16x16xf32, #tpu.memory_space<vmem>>, vector<1x16x16xf32>
    %1 = vector.shape_cast %0 : vector<1x16x16xf32> to vector<16x16xf32>
    %2 = arith.truncf %1 : vector<16x16xf32> to vector<16x16xbf16>
    %c0_2 = arith.constant 0 : index
    %c0_3 = arith.constant 0 : index
    %3 = vector.load %arg2[%c0_2, %c0_3] : memref<32x16xbf16, #tpu.memory_space<vmem>>, vector<32x16xbf16>
    %cst = arith.constant dense<0.000000e+00> : vector<32x16xf32>
    %4 = tpu.matmul %3, %2, %cst {dimension_numbers = #tpu.dot_dimension_numbers<[1], [0], [0], [1], [0, 0, 1, 1], [], []>} : vector<32x16xbf16>, vector<16x16xbf16>, vector<32x16xf32> -> vector<32x16xf32>
    %c0_4 = arith.constant 0 : index
    %c0_5 = arith.constant 0 : index
    %5 = vector.load %arg3[%c0_4, %c0_5] : memref<32x1xf32, #tpu.memory_space<vmem>>, vector<32x1xf32>
    %6 = vector.broadcast %5 : vector<32x1xf32> to vector<32x16xf32>
    %7 = arith.addf %4, %6 : vector<32x16xf32>
    %cst_6 = arith.constant 0.000000e+00 : f32
    %8 = vector.broadcast %cst_6 : f32 to vector<32x16xf32>
    %9 = arith.maximumf %7, %8 : vector<32x16xf32>
    %10 = arith.truncf %9 : vector<32x16xf32> to vector<32x16xbf16>
    %cst_7 = arith.constant 0.000000e+00 : bf16
    %11 = vector.broadcast %cst_7 : bf16 to vector<32x2xbf16>
    %12 = tpu.concatenate %11, %10, %11 in 1 : vector<32x2xbf16>, vector<32x16xbf16>, vector<32x2xbf16> -> vector<32x20xbf16>
    %13 = arith.extf %10 : vector<32x16xbf16> to vector<32x16xf32>
    %c0_8 = arith.constant 0 : index
    %c0_9 = arith.constant 0 : index
    %c0_10 = arith.constant 0 : index
    %14 = vector.load %arg4[%c0_8, %c0_9, %c0_10] : memref<2x32x96xbf16, #tpu.memory_space<vmem>>, vector<1x32x96xbf16>
    %15 = vector.shape_cast %14 : vector<1x32x96xbf16> to vector<32x96xbf16>
    %c0_11 = arith.constant 0 : index
    %c0_12 = arith.constant 0 : index
    %c0_13 = arith.constant 0 : index
    %16 = vector.load %arg5[%c0_11, %c0_12, %c0_13] : memref<2x32x1xf32, #tpu.memory_space<vmem>>, vector<1x32x1xf32>
    %17 = vector.shape_cast %16 : vector<1x32x1xf32> to vector<32x1xf32>
    %18 = vector.extract_strided_slice %12 {offsets = [0, 0], sizes = [32, 16], strides = [1, 1]} : vector<32x20xbf16> to vector<32x16xbf16>
    %19 = vector.extract_strided_slice %12 {offsets = [0, 2], sizes = [32, 16], strides = [1, 1]} : vector<32x20xbf16> to vector<32x16xbf16>
    %20 = vector.extract_strided_slice %12 {offsets = [0, 4], sizes = [32, 16], strides = [1, 1]} : vector<32x20xbf16> to vector<32x16xbf16>
    %21 = tpu.concatenate %18, %19, %20 in 0 : vector<32x16xbf16>, vector<32x16xbf16>, vector<32x16xbf16> -> vector<96x16xbf16>
    %cst_14 = arith.constant dense<0.000000e+00> : vector<32x16xf32>
    %22 = tpu.matmul %15, %21, %cst_14 {dimension_numbers = #tpu.dot_dimension_numbers<[1], [0], [0], [1], [0, 0, 1, 1], [], []>} : vector<32x96xbf16>, vector<96x16xbf16>, vector<32x16xf32> -> vector<32x16xf32>
    %23 = vector.broadcast %17 : vector<32x1xf32> to vector<32x16xf32>
    %24 = arith.addf %22, %23 : vector<32x16xf32>
    %25 = arith.addf %13, %24 : vector<32x16xf32>
    %cst_15 = arith.constant 0.000000e+00 : f32
    %26 = vector.broadcast %cst_15 : f32 to vector<32x16xf32>
    %27 = arith.maximumf %25, %26 : vector<32x16xf32>
    %28 = arith.truncf %27 : vector<32x16xf32> to vector<32x16xbf16>
    %cst_16 = arith.constant 0.000000e+00 : bf16
    %29 = vector.broadcast %cst_16 : bf16 to vector<32x4xbf16>
    %30 = tpu.concatenate %29, %28, %29 in 1 : vector<32x4xbf16>, vector<32x16xbf16>, vector<32x4xbf16> -> vector<32x24xbf16>
    %31 = arith.extf %28 : vector<32x16xbf16> to vector<32x16xf32>
    %c1 = arith.constant 1 : index
    %c0_17 = arith.constant 0 : index
    %c0_18 = arith.constant 0 : index
    %32 = vector.load %arg4[%c1, %c0_17, %c0_18] : memref<2x32x96xbf16, #tpu.memory_space<vmem>>, vector<1x32x96xbf16>
    %33 = vector.shape_cast %32 : vector<1x32x96xbf16> to vector<32x96xbf16>
    %c1_19 = arith.constant 1 : index
    %c0_20 = arith.constant 0 : index
    %c0_21 = arith.constant 0 : index
    %34 = vector.load %arg5[%c1_19, %c0_20, %c0_21] : memref<2x32x1xf32, #tpu.memory_space<vmem>>, vector<1x32x1xf32>
    %35 = vector.shape_cast %34 : vector<1x32x1xf32> to vector<32x1xf32>
    %36 = vector.extract_strided_slice %30 {offsets = [0, 0], sizes = [32, 16], strides = [1, 1]} : vector<32x24xbf16> to vector<32x16xbf16>
    %37 = vector.extract_strided_slice %30 {offsets = [0, 4], sizes = [32, 16], strides = [1, 1]} : vector<32x24xbf16> to vector<32x16xbf16>
    %38 = vector.extract_strided_slice %30 {offsets = [0, 8], sizes = [32, 16], strides = [1, 1]} : vector<32x24xbf16> to vector<32x16xbf16>
    %39 = tpu.concatenate %36, %37, %38 in 0 : vector<32x16xbf16>, vector<32x16xbf16>, vector<32x16xbf16> -> vector<96x16xbf16>
    %cst_22 = arith.constant dense<0.000000e+00> : vector<32x16xf32>
    %40 = tpu.matmul %33, %39, %cst_22 {dimension_numbers = #tpu.dot_dimension_numbers<[1], [0], [0], [1], [0, 0, 1, 1], [], []>} : vector<32x96xbf16>, vector<96x16xbf16>, vector<32x16xf32> -> vector<32x16xf32>
    %41 = vector.broadcast %35 : vector<32x1xf32> to vector<32x16xf32>
    %42 = arith.addf %40, %41 : vector<32x16xf32>
    %43 = arith.addf %31, %42 : vector<32x16xf32>
    %cst_23 = arith.constant 0.000000e+00 : f32
    %44 = vector.broadcast %cst_23 : f32 to vector<32x16xf32>
    %45 = arith.maximumf %43, %44 : vector<32x16xf32>
    %46 = arith.truncf %45 : vector<32x16xf32> to vector<32x16xbf16>
    %cst_24 = arith.constant 0.000000e+00 : bf16
    %47 = vector.broadcast %cst_24 : bf16 to vector<32x4xbf16>
    %48 = tpu.concatenate %47, %46, %47 in 1 : vector<32x4xbf16>, vector<32x16xbf16>, vector<32x4xbf16> -> vector<32x24xbf16>
    %49 = vector.extract_strided_slice %48 {offsets = [0, 3], sizes = [32, 16], strides = [1, 1]} : vector<32x24xbf16> to vector<32x16xbf16>
    %50 = vector.extract_strided_slice %48 {offsets = [0, 4], sizes = [32, 16], strides = [1, 1]} : vector<32x24xbf16> to vector<32x16xbf16>
    %51 = vector.extract_strided_slice %48 {offsets = [0, 5], sizes = [32, 16], strides = [1, 1]} : vector<32x24xbf16> to vector<32x16xbf16>
    %52 = tpu.concatenate %49, %50, %51 in 0 : vector<32x16xbf16>, vector<32x16xbf16>, vector<32x16xbf16> -> vector<96x16xbf16>
    %c0_25 = arith.constant 0 : index
    %c0_26 = arith.constant 0 : index
    %53 = vector.load %arg6[%c0_25, %c0_26] : memref<128x96xbf16, #tpu.memory_space<vmem>>, vector<128x96xbf16>
    %cst_27 = arith.constant dense<0.000000e+00> : vector<128x16xf32>
    %54 = tpu.matmul %53, %52, %cst_27 {dimension_numbers = #tpu.dot_dimension_numbers<[1], [0], [0], [1], [0, 0, 1, 1], [], []>} : vector<128x96xbf16>, vector<96x16xbf16>, vector<128x16xf32> -> vector<128x16xf32>
    %c0_28 = arith.constant 0 : index
    %c0_29 = arith.constant 0 : index
    %55 = vector.load %arg7[%c0_28, %c0_29] : memref<128x1xf32, #tpu.memory_space<vmem>>, vector<128x1xf32>
    %56 = vector.broadcast %55 : vector<128x1xf32> to vector<128x16xf32>
    %57 = arith.addf %54, %56 : vector<128x16xf32>
    %58 = vector.extract_strided_slice %57 {offsets = [0, 0], sizes = [64, 16], strides = [1, 1]} : vector<128x16xf32> to vector<64x16xf32>
    %cst_30 = arith.constant 0.000000e+00 : f32
    %59 = vector.broadcast %cst_30 : f32 to vector<64x16xf32>
    %60 = arith.maximumf %58, %59 : vector<64x16xf32>
    %61 = arith.truncf %60 : vector<64x16xf32> to vector<64x16xbf16>
    %62 = vector.extract_strided_slice %57 {offsets = [64, 0], sizes = [32, 16], strides = [1, 1]} : vector<128x16xf32> to vector<32x16xf32>
    %63 = vector.extract_strided_slice %57 {offsets = [96, 0], sizes = [32, 16], strides = [1, 1]} : vector<128x16xf32> to vector<32x16xf32>
    %cst_31 = arith.constant 0.000000e+00 : f32
    %64 = vector.broadcast %cst_31 : f32 to vector<32x16xf32>
    %65 = arith.maximumf %63, %64 : vector<32x16xf32>
    %66 = arith.truncf %65 : vector<32x16xf32> to vector<32x16xbf16>
    %67 = arith.extf %46 : vector<32x16xbf16> to vector<32x16xf32>
    %68 = arith.addf %67, %62 : vector<32x16xf32>
    %c0_32 = arith.constant 0 : index
    %c0_33 = arith.constant 0 : index
    %c0_34 = arith.constant 0 : index
    %69 = vector.load %arg8[%c0_32, %c0_33, %c0_34] : memref<2x32x96xbf16, #tpu.memory_space<vmem>>, vector<1x32x96xbf16>
    %70 = vector.shape_cast %69 : vector<1x32x96xbf16> to vector<32x96xbf16>
    %c0_35 = arith.constant 0 : index
    %c0_36 = arith.constant 0 : index
    %c0_37 = arith.constant 0 : index
    %71 = vector.load %arg9[%c0_35, %c0_36, %c0_37] : memref<2x32x1xf32, #tpu.memory_space<vmem>>, vector<1x32x1xf32>
    %72 = vector.shape_cast %71 : vector<1x32x1xf32> to vector<32x1xf32>
    %73 = vector.extract_strided_slice %48 {offsets = [0, 2], sizes = [32, 16], strides = [1, 1]} : vector<32x24xbf16> to vector<32x16xbf16>
    %74 = vector.extract_strided_slice %48 {offsets = [0, 4], sizes = [32, 16], strides = [1, 1]} : vector<32x24xbf16> to vector<32x16xbf16>
    %75 = vector.extract_strided_slice %48 {offsets = [0, 6], sizes = [32, 16], strides = [1, 1]} : vector<32x24xbf16> to vector<32x16xbf16>
    %76 = tpu.concatenate %73, %74, %75 in 0 : vector<32x16xbf16>, vector<32x16xbf16>, vector<32x16xbf16> -> vector<96x16xbf16>
    %cst_38 = arith.constant dense<0.000000e+00> : vector<32x16xf32>
    %77 = tpu.matmul %70, %76, %cst_38 {dimension_numbers = #tpu.dot_dimension_numbers<[1], [0], [0], [1], [0, 0, 1, 1], [], []>} : vector<32x96xbf16>, vector<96x16xbf16>, vector<32x16xf32> -> vector<32x16xf32>
    %78 = vector.broadcast %72 : vector<32x1xf32> to vector<32x16xf32>
    %79 = arith.addf %77, %78 : vector<32x16xf32>
    %80 = arith.addf %68, %79 : vector<32x16xf32>
    %c1_39 = arith.constant 1 : index
    %c0_40 = arith.constant 0 : index
    %c0_41 = arith.constant 0 : index
    %81 = vector.load %arg8[%c1_39, %c0_40, %c0_41] : memref<2x32x96xbf16, #tpu.memory_space<vmem>>, vector<1x32x96xbf16>
    %82 = vector.shape_cast %81 : vector<1x32x96xbf16> to vector<32x96xbf16>
    %c1_42 = arith.constant 1 : index
    %c0_43 = arith.constant 0 : index
    %c0_44 = arith.constant 0 : index
    %83 = vector.load %arg9[%c1_42, %c0_43, %c0_44] : memref<2x32x1xf32, #tpu.memory_space<vmem>>, vector<1x32x1xf32>
    %84 = vector.shape_cast %83 : vector<1x32x1xf32> to vector<32x1xf32>
    %85 = vector.extract_strided_slice %48 {offsets = [0, 0], sizes = [32, 16], strides = [1, 1]} : vector<32x24xbf16> to vector<32x16xbf16>
    %86 = vector.extract_strided_slice %48 {offsets = [0, 4], sizes = [32, 16], strides = [1, 1]} : vector<32x24xbf16> to vector<32x16xbf16>
    %87 = vector.extract_strided_slice %48 {offsets = [0, 8], sizes = [32, 16], strides = [1, 1]} : vector<32x24xbf16> to vector<32x16xbf16>
    %88 = tpu.concatenate %85, %86, %87 in 0 : vector<32x16xbf16>, vector<32x16xbf16>, vector<32x16xbf16> -> vector<96x16xbf16>
    %cst_45 = arith.constant dense<0.000000e+00> : vector<32x16xf32>
    %89 = tpu.matmul %82, %88, %cst_45 {dimension_numbers = #tpu.dot_dimension_numbers<[1], [0], [0], [1], [0, 0, 1, 1], [], []>} : vector<32x96xbf16>, vector<96x16xbf16>, vector<32x16xf32> -> vector<32x16xf32>
    %90 = vector.broadcast %84 : vector<32x1xf32> to vector<32x16xf32>
    %91 = arith.addf %89, %90 : vector<32x16xf32>
    %92 = arith.addf %80, %91 : vector<32x16xf32>
    %cst_46 = arith.constant 0.000000e+00 : f32
    %93 = vector.broadcast %cst_46 : f32 to vector<32x16xf32>
    %94 = arith.maximumf %92, %93 : vector<32x16xf32>
    %95 = arith.truncf %94 : vector<32x16xf32> to vector<32x16xbf16>
    %cst_47 = arith.constant 0.000000e+00 : bf16
    %96 = vector.broadcast %cst_47 : bf16 to vector<32x1xbf16>
    %97 = tpu.concatenate %96, %95, %96 in 1 : vector<32x1xbf16>, vector<32x16xbf16>, vector<32x1xbf16> -> vector<32x18xbf16>
    %98 = vector.extract_strided_slice %97 {offsets = [0, 0], sizes = [32, 16], strides = [1, 1]} : vector<32x18xbf16> to vector<32x16xbf16>
    %99 = vector.extract_strided_slice %97 {offsets = [0, 1], sizes = [32, 16], strides = [1, 1]} : vector<32x18xbf16> to vector<32x16xbf16>
    %100 = vector.extract_strided_slice %97 {offsets = [0, 2], sizes = [32, 16], strides = [1, 1]} : vector<32x18xbf16> to vector<32x16xbf16>
    %101 = tpu.concatenate %98, %99, %100 in 0 : vector<32x16xbf16>, vector<32x16xbf16>, vector<32x16xbf16> -> vector<96x16xbf16>
    %c0_48 = arith.constant 0 : index
    %c0_49 = arith.constant 0 : index
    %102 = vector.load %arg10[%c0_48, %c0_49] : memref<64x96xbf16, #tpu.memory_space<vmem>>, vector<64x96xbf16>
    %cst_50 = arith.constant dense<0.000000e+00> : vector<64x16xf32>
    %103 = tpu.matmul %102, %101, %cst_50 {dimension_numbers = #tpu.dot_dimension_numbers<[1], [0], [0], [1], [0, 0, 1, 1], [], []>} : vector<64x96xbf16>, vector<96x16xbf16>, vector<64x16xf32> -> vector<64x16xf32>
    %c0_51 = arith.constant 0 : index
    %c0_52 = arith.constant 0 : index
    %104 = vector.load %arg11[%c0_51, %c0_52] : memref<64x1xf32, #tpu.memory_space<vmem>>, vector<64x1xf32>
    %105 = vector.broadcast %104 : vector<64x1xf32> to vector<64x16xf32>
    %106 = arith.addf %103, %105 : vector<64x16xf32>
    %cst_53 = arith.constant 0.000000e+00 : f32
    %107 = vector.broadcast %cst_53 : f32 to vector<64x16xf32>
    %108 = arith.maximumf %106, %107 : vector<64x16xf32>
    %109 = arith.truncf %108 : vector<64x16xf32> to vector<64x16xbf16>
    %c0_54 = arith.constant 0 : index
    %c0_55 = arith.constant 0 : index
    %110 = vector.load %arg12[%c0_54, %c0_55] : memref<2x64xbf16, #tpu.memory_space<vmem>>, vector<2x64xbf16>
    %cst_56 = arith.constant dense<0.000000e+00> : vector<2x16xf32>
    %111 = tpu.matmul %110, %109, %cst_56 {dimension_numbers = #tpu.dot_dimension_numbers<[1], [0], [0], [1], [0, 0, 1, 1], [], []>} : vector<2x64xbf16>, vector<64x16xbf16>, vector<2x16xf32> -> vector<2x16xf32>
    %c0_57 = arith.constant 0 : index
    %c0_58 = arith.constant 0 : index
    %112 = vector.load %arg13[%c0_57, %c0_58] : memref<2x1xf32, #tpu.memory_space<vmem>>, vector<2x1xf32>
    %113 = vector.broadcast %112 : vector<2x1xf32> to vector<2x16xf32>
    %114 = arith.addf %111, %113 : vector<2x16xf32>
    %115 = arith.negf %114 : vector<2x16xf32>
    %116 = math.exp %115 : vector<2x16xf32>
    %cst_59 = arith.constant 1.000000e+00 : f32
    %117 = vector.broadcast %cst_59 : f32 to vector<2x16xf32>
    %118 = arith.addf %117, %116 : vector<2x16xf32>
    %119 = arith.divf %117, %118 : vector<2x16xf32>
    %c0_60 = arith.constant 0 : index
    %c0_61 = arith.constant 0 : index
    %120 = vector.load %arg14[%c0_60, %c0_61] : memref<2x64xbf16, #tpu.memory_space<vmem>>, vector<2x64xbf16>
    %cst_62 = arith.constant dense<0.000000e+00> : vector<2x16xf32>
    %121 = tpu.matmul %120, %61, %cst_62 {dimension_numbers = #tpu.dot_dimension_numbers<[1], [0], [0], [1], [0, 0, 1, 1], [], []>} : vector<2x64xbf16>, vector<64x16xbf16>, vector<2x16xf32> -> vector<2x16xf32>
    %c0_63 = arith.constant 0 : index
    %c0_64 = arith.constant 0 : index
    %122 = vector.load %arg15[%c0_63, %c0_64] : memref<2x1xf32, #tpu.memory_space<vmem>>, vector<2x1xf32>
    %123 = vector.broadcast %122 : vector<2x1xf32> to vector<2x16xf32>
    %124 = arith.addf %121, %123 : vector<2x16xf32>
    %125 = arith.negf %124 : vector<2x16xf32>
    %126 = math.exp %125 : vector<2x16xf32>
    %cst_65 = arith.constant 1.000000e+00 : f32
    %127 = vector.broadcast %cst_65 : f32 to vector<2x16xf32>
    %128 = arith.addf %127, %126 : vector<2x16xf32>
    %129 = arith.divf %127, %128 : vector<2x16xf32>
    %130 = tpu.concatenate %119, %129 in 0 : vector<2x16xf32>, vector<2x16xf32> -> vector<4x16xf32>
    %c0_66 = arith.constant 0 : index
    %c0_67 = arith.constant 0 : index
    %c0_68 = arith.constant 0 : index
    %131 = vector.load %arg21[%c0_66, %c0_67, %c0_68] : memref<1x4x16xf32, #tpu.memory_space<vmem>>, vector<1x4x16xf32>
    %132 = vector.shape_cast %131 : vector<1x4x16xf32> to vector<4x16xf32>
    %133 = vector.shape_cast %130 : vector<4x16xf32> to vector<1x4x16xf32>
    tpu.vector_store %arg21[%c0_66, %c0_67, %c0_68], %133 {strides = array<i32>} : memref<1x4x16xf32, #tpu.memory_space<vmem>>, vector<1x4x16xf32>,
    %c0_69 = arith.constant 0 : index
    %c0_70 = arith.constant 0 : index
    %134 = vector.load %arg16[%c0_69, %c0_70] : memref<32x32xbf16, #tpu.memory_space<vmem>>, vector<32x32xbf16>
    %cst_71 = arith.constant dense<0.000000e+00> : vector<32x16xf32>
    %135 = tpu.matmul %134, %66, %cst_71 {dimension_numbers = #tpu.dot_dimension_numbers<[1], [0], [0], [1], [0, 0, 1, 1], [], []>} : vector<32x32xbf16>, vector<32x16xbf16>, vector<32x16xf32> -> vector<32x16xf32>
    %136 = arith.truncf %135 : vector<32x16xf32> to vector<32x16xbf16>
    %c0_72 = arith.constant 0 : index
    %c0_73 = arith.constant 0 : index
    %137 = vector.load %arg20[%c0_72, %c0_73] : memref<16x256xbf16, #tpu.memory_space<vmem>>, vector<16x256xbf16>
    %cst_74 = arith.constant dense<0.000000e+00> : vector<32x256xf32>
    %138 = tpu.matmul %136, %137, %cst_74 {dimension_numbers = #tpu.dot_dimension_numbers<[1], [0], [0], [1], [0, 0, 1, 1], [], []>} : vector<32x16xbf16>, vector<16x256xbf16>, vector<32x256xf32> -> vector<32x256xf32>
    %c0_75 = arith.constant 0 : index
    %c0_76 = arith.constant 0 : index
    %139 = vector.load %arg17[%c0_75, %c0_76] : memref<32x1xf32, #tpu.memory_space<vmem>>, vector<32x1xf32>
    %140 = vector.broadcast %139 : vector<32x1xf32> to vector<32x256xf32>
    %141 = arith.addf %138, %140 : vector<32x256xf32>
    %cst_77 = arith.constant 0.000000e+00 : f32
    %142 = vector.broadcast %cst_77 : f32 to vector<32x256xf32>
    %143 = arith.maximumf %141, %142 : vector<32x256xf32>
    %c0_78 = arith.constant 0 : index
    %c0_79 = arith.constant 0 : index
    %144 = vector.load %arg18[%c0_78, %c0_79] : memref<2x32xbf16, #tpu.memory_space<vmem>>, vector<2x32xbf16>
    %145 = arith.truncf %143 : vector<32x256xf32> to vector<32x256xbf16>
    %cst_80 = arith.constant dense<0.000000e+00> : vector<2x256xf32>
    %146 = tpu.matmul %144, %145, %cst_80 {dimension_numbers = #tpu.dot_dimension_numbers<[1], [0], [0], [1], [0, 0, 1, 1], [], []>} : vector<2x32xbf16>, vector<32x256xbf16>, vector<2x256xf32> -> vector<2x256xf32>
    %c0_81 = arith.constant 0 : index
    %c0_82 = arith.constant 0 : index
    %147 = vector.load %arg19[%c0_81, %c0_82] : memref<2x1xf32, #tpu.memory_space<vmem>>, vector<2x1xf32>
    %148 = vector.broadcast %147 : vector<2x1xf32> to vector<2x256xf32>
    %149 = arith.addf %146, %148 : vector<2x256xf32>
    %150 = arith.negf %149 : vector<2x256xf32>
    %151 = math.exp %150 : vector<2x256xf32>
    %cst_83 = arith.constant 1.000000e+00 : f32
    %152 = vector.broadcast %cst_83 : f32 to vector<2x256xf32>
    %153 = arith.addf %152, %151 : vector<2x256xf32>
    %154 = arith.divf %152, %153 : vector<2x256xf32>
    %c0_84 = arith.constant 0 : index
    %c0_85 = arith.constant 0 : index
    %c0_86 = arith.constant 0 : index
    %155 = vector.load %arg22[%c0_84, %c0_85, %c0_86] : memref<1x2x256xf32, #tpu.memory_space<vmem>>, vector<1x2x256xf32>
    %156 = vector.shape_cast %155 : vector<1x2x256xf32> to vector<2x256xf32>
    %157 = vector.shape_cast %154 : vector<2x256xf32> to vector<1x2x256xf32>
    tpu.vector_store %arg22[%c0_84, %c0_85, %c0_86], %157 {strides = array<i32>} : memref<1x2x256xf32, #tpu.memory_space<vmem>>, vector<1x2x256xf32>,
    return
  }
  func.func @transform_0(%arg0: i32) -> (i32, i32, i32) {
    %c0_i32 = arith.constant 0 : i32
    %c0_i32_0 = arith.constant 0 : i32
    %c0_i32_1 = arith.constant 0 : i32
    return %arg0, %c0_i32, %c0_i32_0 : i32, i32, i32
  }
  func.func @transform_1(%arg0: i32) -> (i32, i32) {
    %c0_i32 = arith.constant 0 : i32
    %c0_i32_0 = arith.constant 0 : i32
    %c0_i32_1 = arith.constant 0 : i32
    return %c0_i32, %c0_i32_0 : i32, i32
  }
  func.func @transform_2(%arg0: i32) -> (i32, i32) {
    %c0_i32 = arith.constant 0 : i32
    %c0_i32_0 = arith.constant 0 : i32
    %c0_i32_1 = arith.constant 0 : i32
    return %c0_i32, %c0_i32_0 : i32, i32
  }
  func.func @transform_3(%arg0: i32) -> (i32, i32, i32) {
    %c0_i32 = arith.constant 0 : i32
    %c0_i32_0 = arith.constant 0 : i32
    %c0_i32_1 = arith.constant 0 : i32
    %c0_i32_2 = arith.constant 0 : i32
    return %c0_i32, %c0_i32_0, %c0_i32_1 : i32, i32, i32
  }
  func.func @transform_4(%arg0: i32) -> (i32, i32, i32) {
    %c0_i32 = arith.constant 0 : i32
    %c0_i32_0 = arith.constant 0 : i32
    %c0_i32_1 = arith.constant 0 : i32
    %c0_i32_2 = arith.constant 0 : i32
    return %c0_i32, %c0_i32_0, %c0_i32_1 : i32, i32, i32
  }
  func.func @transform_5(%arg0: i32) -> (i32, i32) {
    %c0_i32 = arith.constant 0 : i32
    %c0_i32_0 = arith.constant 0 : i32
    %c0_i32_1 = arith.constant 0 : i32
    return %c0_i32, %c0_i32_0 : i32, i32
  }
  func.func @transform_6(%arg0: i32) -> (i32, i32) {
    %c0_i32 = arith.constant 0 : i32
    %c0_i32_0 = arith.constant 0 : i32
    %c0_i32_1 = arith.constant 0 : i32
    return %c0_i32, %c0_i32_0 : i32, i32
  }
  func.func @transform_7(%arg0: i32) -> (i32, i32, i32) {
    %c0_i32 = arith.constant 0 : i32
    %c0_i32_0 = arith.constant 0 : i32
    %c0_i32_1 = arith.constant 0 : i32
    %c0_i32_2 = arith.constant 0 : i32
    return %c0_i32, %c0_i32_0, %c0_i32_1 : i32, i32, i32
  }
  func.func @transform_8(%arg0: i32) -> (i32, i32, i32) {
    %c0_i32 = arith.constant 0 : i32
    %c0_i32_0 = arith.constant 0 : i32
    %c0_i32_1 = arith.constant 0 : i32
    %c0_i32_2 = arith.constant 0 : i32
    return %c0_i32, %c0_i32_0, %c0_i32_1 : i32, i32, i32
  }
  func.func @transform_9(%arg0: i32) -> (i32, i32) {
    %c0_i32 = arith.constant 0 : i32
    %c0_i32_0 = arith.constant 0 : i32
    %c0_i32_1 = arith.constant 0 : i32
    return %c0_i32, %c0_i32_0 : i32, i32
  }
  func.func @transform_10(%arg0: i32) -> (i32, i32) {
    %c0_i32 = arith.constant 0 : i32
    %c0_i32_0 = arith.constant 0 : i32
    %c0_i32_1 = arith.constant 0 : i32
    return %c0_i32, %c0_i32_0 : i32, i32
  }
  func.func @transform_11(%arg0: i32) -> (i32, i32) {
    %c0_i32 = arith.constant 0 : i32
    %c0_i32_0 = arith.constant 0 : i32
    %c0_i32_1 = arith.constant 0 : i32
    return %c0_i32, %c0_i32_0 : i32, i32
  }
  func.func @transform_12(%arg0: i32) -> (i32, i32) {
    %c0_i32 = arith.constant 0 : i32
    %c0_i32_0 = arith.constant 0 : i32
    %c0_i32_1 = arith.constant 0 : i32
    return %c0_i32, %c0_i32_0 : i32, i32
  }
  func.func @transform_13(%arg0: i32) -> (i32, i32) {
    %c0_i32 = arith.constant 0 : i32
    %c0_i32_0 = arith.constant 0 : i32
    %c0_i32_1 = arith.constant 0 : i32
    return %c0_i32, %c0_i32_0 : i32, i32
  }
  func.func @transform_14(%arg0: i32) -> (i32, i32) {
    %c0_i32 = arith.constant 0 : i32
    %c0_i32_0 = arith.constant 0 : i32
    %c0_i32_1 = arith.constant 0 : i32
    return %c0_i32, %c0_i32_0 : i32, i32
  }
  func.func @transform_15(%arg0: i32) -> (i32, i32) {
    %c0_i32 = arith.constant 0 : i32
    %c0_i32_0 = arith.constant 0 : i32
    %c0_i32_1 = arith.constant 0 : i32
    return %c0_i32, %c0_i32_0 : i32, i32
  }
  func.func @transform_16(%arg0: i32) -> (i32, i32) {
    %c0_i32 = arith.constant 0 : i32
    %c0_i32_0 = arith.constant 0 : i32
    %c0_i32_1 = arith.constant 0 : i32
    return %c0_i32, %c0_i32_0 : i32, i32
  }
  func.func @transform_17(%arg0: i32) -> (i32, i32) {
    %c0_i32 = arith.constant 0 : i32
    %c0_i32_0 = arith.constant 0 : i32
    %c0_i32_1 = arith.constant 0 : i32
    return %c0_i32, %c0_i32_0 : i32, i32
  }
  func.func @transform_18(%arg0: i32) -> (i32, i32) {
    %c0_i32 = arith.constant 0 : i32
    %c0_i32_0 = arith.constant 0 : i32
    %c0_i32_1 = arith.constant 0 : i32
    return %c0_i32, %c0_i32_0 : i32, i32
  }
  func.func @transform_19(%arg0: i32) -> (i32, i32) {
    %c0_i32 = arith.constant 0 : i32
    %c0_i32_0 = arith.constant 0 : i32
    %c0_i32_1 = arith.constant 0 : i32
    return %c0_i32, %c0_i32_0 : i32, i32
  }
  func.func @transform_20(%arg0: i32) -> (i32, i32, i32) {
    %c0_i32 = arith.constant 0 : i32
    %c0_i32_0 = arith.constant 0 : i32
    %c0_i32_1 = arith.constant 0 : i32
    return %arg0, %c0_i32, %c0_i32_0 : i32, i32, i32
  }
  func.func @transform_21(%arg0: i32) -> (i32, i32, i32) {
    %c0_i32 = arith.constant 0 : i32
    %c0_i32_0 = arith.constant 0 : i32
    %c0_i32_1 = arith.constant 0 : i32
    return %arg0, %c0_i32, %c0_i32_0 : i32, i32, i32
  }
}

</mosaic_0001>

<llo_original>
// kernel: dcan_forward.1
$region0: #{dcan_forward.1}
  #allocation0 [shape = 'u32[]', space=smem, size = 0x4, offset = 0x4, fixed_abs, tag = 'smem constant byte address 0x4 - core index']
  #allocation1 [shape = 'u32[144,128]{1,0:T(1,128)}', space=vmem, size = 0x12000, scoped, tag = 'internal scratch']
  %s0 = inlined_call_operand.vmem [shape: f32[2,16,16], index: 0, kind: input, shape index: {}]
  %s1 = inlined_call_operand.vmem [shape: bf16[32,16], index: 1, kind: input, shape index: {}]
  %s2 = inlined_call_operand.vmem [shape: f32[32,1], index: 2, kind: input, shape index: {}]
  %s3 = inlined_call_operand.vmem [shape: bf16[2,32,96], index: 3, kind: input, shape index: {}]
  %s4 = inlined_call_operand.vmem [shape: f32[2,32,1], index: 4, kind: input, shape index: {}]
  %s5 = inlined_call_operand.vmem [shape: bf16[128,96], index: 5, kind: input, shape index: {}]
  %s6 = inlined_call_operand.vmem [shape: f32[128,1], index: 6, kind: input, shape index: {}]
  %s7 = inlined_call_operand.vmem [shape: bf16[2,32,96], index: 7, kind: input, shape index: {}]
  %s8 = inlined_call_operand.vmem [shape: f32[2,32,1], index: 8, kind: input, shape index: {}]
  %s9 = inlined_call_operand.vmem [shape: bf16[64,96], index: 9, kind: input, shape index: {}]
  %s10 = inlined_call_operand.vmem [shape: f32[64,1], index: 10, kind: input, shape index: {}]
  %s11 = inlined_call_operand.vmem [shape: bf16[2,64], index: 11, kind: input, shape index: {}]
  %s12 = inlined_call_operand.vmem [shape: f32[2,1], index: 12, kind: input, shape index: {}]
  %s13 = inlined_call_operand.vmem [shape: bf16[2,64], index: 13, kind: input, shape index: {}]
  %s14 = inlined_call_operand.vmem [shape: f32[2,1], index: 14, kind: input, shape index: {}]
  %s15 = inlined_call_operand.vmem [shape: bf16[32,32], index: 15, kind: input, shape index: {}]
  %s16 = inlined_call_operand.vmem [shape: f32[32,1], index: 16, kind: input, shape index: {}]
  %s17 = inlined_call_operand.vmem [shape: bf16[2,32], index: 17, kind: input, shape index: {}]
  %s18 = inlined_call_operand.vmem [shape: f32[2,1], index: 18, kind: input, shape index: {}]
  %s19 = inlined_call_operand.vmem [shape: bf16[16,256], index: 19, kind: input, shape index: {}]
  %s20 = inlined_call_operand.vmem [shape: f32[2,4,16], index: 20, kind: output, shape index: {0}]
  %s21 = inlined_call_operand.vmem [shape: f32[2,2,256], index: 21, kind: output, shape index: {1}]
  %22 = xla_tuple %s20, %s21
  %s23 = sld [smem:[#allocation0]]
  $region121: #{dcan_forward.1} parent=0
    _
  %s25 = ssub.s32 1, %s23
  %s26 = scalar_select 0, %s25, %s23
  loop: start=0, step=1, limit=4
  $region2: #{dcan_forward.1} parent=0 // loop_pre_header
    _
  $region3: #{dcan_forward.1} parent=0 // loop_header
    %s28 = sphi 0, %s32
    %p29 = scmp.ge.s32.totalorder %s28, 4
    %s38 = sphi 0, %s40
    %s41 = sphi 0, %s38
    %s42 = sphi 0, %s41
    %s58 = sphi 0, %s42
    %s62 = sphi 0, %s62
    %s64 = sphi 0, %s62
    %s65 = sphi 0, %s64
    %s79 = sphi 0, %s65
    %s83 = sphi 0, %s83
    %s85 = sphi 0, %s83
    %s86 = sphi 0, %s85
    %s100 = sphi 0, %s86
    %s104 = sphi 0, %s104
    %s106 = sphi 0, %s104
    %s107 = sphi 0, %s106
    %s121 = sphi 0, %s107
    %s125 = sphi 0, %s125
    %s127 = sphi 0, %s125
    %s128 = sphi 0, %s127
    %s142 = sphi 0, %s128
    %s146 = sphi 0, %s146
    %s148 = sphi 0, %s146
    %s149 = sphi 0, %s148
    %s163 = sphi 0, %s149
    %s167 = sphi 0, %s167
    %s169 = sphi 0, %s167
    %s170 = sphi 0, %s169
    %s184 = sphi 0, %s170
    %s188 = sphi 0, %s188
    %s190 = sphi 0, %s188
    %s191 = sphi 0, %s190
    %s205 = sphi 0, %s191
    %s209 = sphi 0, %s209
    %s211 = sphi 0, %s209
    %s212 = sphi 0, %s211
    %s226 = sphi 0, %s212
    %s230 = sphi 0, %s230
    %s232 = sphi 0, %s230
    %s233 = sphi 0, %s232
    %s247 = sphi 0, %s233
    %s251 = sphi 0, %s251
    %s253 = sphi 0, %s251
    %s254 = sphi 0, %s253
    %s268 = sphi 0, %s254
    %s272 = sphi 0, %s272
    %s274 = sphi 0, %s272
    %s275 = sphi 0, %s274
    %s289 = sphi 0, %s275
    %s293 = sphi 0, %s293
    %s295 = sphi 0, %s293
    %s296 = sphi 0, %s295
    %s310 = sphi 0, %s296
    %s314 = sphi 0, %s314
    %s316 = sphi 0, %s314
    %s317 = sphi 0, %s316
    %s331 = sphi 0, %s317
    %s335 = sphi 0, %s335
    %s337 = sphi 0, %s335
    %s338 = sphi 0, %s337
    %s352 = sphi 0, %s338
    %s356 = sphi 0, %s356
    %s358 = sphi 0, %s356
    %s359 = sphi 0, %s358
    %s373 = sphi 0, %s359
    %s377 = sphi 0, %s377
    %s379 = sphi 0, %s377
    %s380 = sphi 0, %s379
    %s394 = sphi 0, %s380
    %s398 = sphi 0, %s398
    %s400 = sphi 0, %s398
    %s401 = sphi 0, %s400
    %s415 = sphi 0, %s401
    %s419 = sphi 0, %s419
    %s421 = sphi 0, %s419
    %s422 = sphi 0, %s421
    %s436 = sphi 0, %s422
    %s440 = sphi 0, %s440
    %s442 = sphi 0, %s440
    %s443 = sphi 0, %s442
    %s457 = sphi 0, %s443
    %s463 = sphi 0, %s465
    %s466 = sphi 0, %s463
    %s467 = sphi 0, %s466
    %s483 = sphi 0, %s467
    %s489 = sphi 0, %s491
    %s492 = sphi 0, %s489
    %s493 = sphi 0, %s492
    %s509 = sphi 0, %s493
  $region4: #{dcan_forward.1} parent=0 // loop_header_branch
    %31 = sbr.rel (%p29) target = $region8
  $region5: #{dcan_forward.1} parent=0 // loop_body
    %s33 = ssub.s32 %s28, 1
    %s34 = ssub.s32 %s28, 2
    %s35 = sadd.s32 %s28, 1
    %s36 = ssub.s32 %s28, %s35
    %p37 = scmp.eq.s32.totalorder %s36, 0
    %s39 = sadd.s32 %s38, 1
    %s40 = scalar_select %p37, %s38, %s39
    %p43 = pneg %p37
    %p44 = scmp.eq.s32.totalorder %s28, 1
    %p45 = por %p43, %p44
    %p46 = scmp.ne.s32.totalorder %s38, %s41
    %p47 = scmp.eq.s32.totalorder %s28, 0
    %p48 = por %p46, %p47
    %p49 = scmp.ne.s32.totalorder %s38, %s41
    %p50 = scmp.eq.s32.totalorder %s33, 1
    %p51 = por %p49, %p50
    %p52 = scmp.ne.s32.totalorder %s41, %s42
    %p53 = scmp.eq.s32.totalorder %s33, 0
    %p54 = por %p52, %p53
    %p55 = scmp.ne.s32.totalorder %s41, %s42
    %p56 = scmp.eq.s32.totalorder %s34, 1
    %p57 = por %p55, %p56
    %p59 = scmp.ne.s32.totalorder %s42, %s58
    %p60 = scmp.eq.s32.totalorder %s34, 0
    %p61 = por %p59, %p60
    %s63 = sadd.s32 %s62, 1
    %p66 = scmp.eq.s32.totalorder %s28, 1
    %p67 = scmp.ne.s32.totalorder %s62, %s64
    %p68 = scmp.eq.s32.totalorder %s28, 0
    %p69 = por %p67, %p68
    %p70 = scmp.ne.s32.totalorder %s62, %s64
    %p71 = scmp.eq.s32.totalorder %s33, 1
    %p72 = por %p70, %p71
    %p73 = scmp.ne.s32.totalorder %s64, %s65
    %p74 = scmp.eq.s32.totalorder %s33, 0
    %p75 = por %p73, %p74
    %p76 = scmp.ne.s32.totalorder %s64, %s65
    %p77 = scmp.eq.s32.totalorder %s34, 1
    %p78 = por %p76, %p77
    %p80 = scmp.ne.s32.totalorder %s65, %s79
    %p81 = scmp.eq.s32.totalorder %s34, 0
    %p82 = por %p80, %p81
    %s84 = sadd.s32 %s83, 1
    %p87 = scmp.eq.s32.totalorder %s28, 1
    %p88 = scmp.ne.s32.totalorder %s83, %s85
    %p89 = scmp.eq.s32.totalorder %s28, 0
    %p90 = por %p88, %p89
    %p91 = scmp.ne.s32.totalorder %s83, %s85
    %p92 = scmp.eq.s32.totalorder %s33, 1
    %p93 = por %p91, %p92
    %p94 = scmp.ne.s32.totalorder %s85, %s86
    %p95 = scmp.eq.s32.totalorder %s33, 0
    %p96 = por %p94, %p95
    %p97 = scmp.ne.s32.totalorder %s85, %s86
    %p98 = scmp.eq.s32.totalorder %s34, 1
    %p99 = por %p97, %p98
    %p101 = scmp.ne.s32.totalorder %s86, %s100
    %p102 = scmp.eq.s32.totalorder %s34, 0
    %p103 = por %p101, %p102
    %s105 = sadd.s32 %s104, 1
    %p108 = scmp.eq.s32.totalorder %s28, 1
    %p109 = scmp.ne.s32.totalorder %s104, %s106
    %p110 = scmp.eq.s32.totalorder %s28, 0
    %p111 = por %p109, %p110
    %p112 = scmp.ne.s32.totalorder %s104, %s106
    %p113 = scmp.eq.s32.totalorder %s33, 1
    %p114 = por %p112, %p113
    %p115 = scmp.ne.s32.totalorder %s106, %s107
    %p116 = scmp.eq.s32.totalorder %s33, 0
    %p117 = por %p115, %p116
    %p118 = scmp.ne.s32.totalorder %s106, %s107
    %p119 = scmp.eq.s32.totalorder %s34, 1
    %p120 = por %p118, %p119
    %p122 = scmp.ne.s32.totalorder %s107, %s121
    %p123 = scmp.eq.s32.totalorder %s34, 0
    %p124 = por %p122, %p123
    %s126 = sadd.s32 %s125, 1
    %p129 = scmp.eq.s32.totalorder %s28, 1
    %p130 = scmp.ne.s32.totalorder %s125, %s127
    %p131 = scmp.eq.s32.totalorder %s28, 0
    %p132 = por %p130, %p131
    %p133 = scmp.ne.s32.totalorder %s125, %s127
    %p134 = scmp.eq.s32.totalorder %s33, 1
    %p135 = por %p133, %p134
    %p136 = scmp.ne.s32.totalorder %s127, %s128
    %p137 = scmp.eq.s32.totalorder %s33, 0
    %p138 = por %p136, %p137
    %p139 = scmp.ne.s32.totalorder %s127, %s128
    %p140 = scmp.eq.s32.totalorder %s34, 1
    %p141 = por %p139, %p140
    %p143 = scmp.ne.s32.totalorder %s128, %s142
    %p144 = scmp.eq.s32.totalorder %s34, 0
    %p145 = por %p143, %p144
    %s147 = sadd.s32 %s146, 1
    %p150 = scmp.eq.s32.totalorder %s28, 1
    %p151 = scmp.ne.s32.totalorder %s146, %s148
    %p152 = scmp.eq.s32.totalorder %s28, 0
    %p153 = por %p151, %p152
    %p154 = scmp.ne.s32.totalorder %s146, %s148
    %p155 = scmp.eq.s32.totalorder %s33, 1
    %p156 = por %p154, %p155
    %p157 = scmp.ne.s32.totalorder %s148, %s149
    %p158 = scmp.eq.s32.totalorder %s33, 0
    %p159 = por %p157, %p158
    %p160 = scmp.ne.s32.totalorder %s148, %s149
    %p161 = scmp.eq.s32.totalorder %s34, 1
    %p162 = por %p160, %p161
    %p164 = scmp.ne.s32.totalorder %s149, %s163
    %p165 = scmp.eq.s32.totalorder %s34, 0
    %p166 = por %p164, %p165
    %s168 = sadd.s32 %s167, 1
    %p171 = scmp.eq.s32.totalorder %s28, 1
    %p172 = scmp.ne.s32.totalorder %s167, %s169
    %p173 = scmp.eq.s32.totalorder %s28, 0
    %p174 = por %p172, %p173
    %p175 = scmp.ne.s32.totalorder %s167, %s169
    %p176 = scmp.eq.s32.totalorder %s33, 1
    %p177 = por %p175, %p176
    %p178 = scmp.ne.s32.totalorder %s169, %s170
    %p179 = scmp.eq.s32.totalorder %s33, 0
    %p180 = por %p178, %p179
    %p181 = scmp.ne.s32.totalorder %s169, %s170
    %p182 = scmp.eq.s32.totalorder %s34, 1
    %p183 = por %p181, %p182
    %p185 = scmp.ne.s32.totalorder %s170, %s184
    %p186 = scmp.eq.s32.totalorder %s34, 0
    %p187 = por %p185, %p186
    %s189 = sadd.s32 %s188, 1
    %p192 = scmp.eq.s32.totalorder %s28, 1
    %p193 = scmp.ne.s32.totalorder %s188, %s190
    %p194 = scmp.eq.s32.totalorder %s28, 0
    %p195 = por %p193, %p194
    %p196 = scmp.ne.s32.totalorder %s188, %s190
    %p197 = scmp.eq.s32.totalorder %s33, 1
    %p198 = por %p196, %p197
    %p199 = scmp.ne.s32.totalorder %s190, %s191
    %p200 = scmp.eq.s32.totalorder %s33, 0
    %p201 = por %p199, %p200
    %p202 = scmp.ne.s32.totalorder %s190, %s191
    %p203 = scmp.eq.s32.totalorder %s34, 1
    %p204 = por %p202, %p203
    %p206 = scmp.ne.s32.totalorder %s191, %s205
    %p207 = scmp.eq.s32.totalorder %s34, 0
    %p208 = por %p206, %p207
    %s210 = sadd.s32 %s209, 1
    %p213 = scmp.eq.s32.totalorder %s28, 1
    %p214 = scmp.ne.s32.totalorder %s209, %s211
    %p215 = scmp.eq.s32.totalorder %s28, 0
    %p216 = por %p214, %p215
    %p217 = scmp.ne.s32.totalorder %s209, %s211
    %p218 = scmp.eq.s32.totalorder %s33, 1
    %p219 = por %p217, %p218
    %p220 = scmp.ne.s32.totalorder %s211, %s212
    %p221 = scmp.eq.s32.totalorder %s33, 0
    %p222 = por %p220, %p221
    %p223 = scmp.ne.s32.totalorder %s211, %s212
    %p224 = scmp.eq.s32.totalorder %s34, 1
    %p225 = por %p223, %p224
    %p227 = scmp.ne.s32.totalorder %s212, %s226
    %p228 = scmp.eq.s32.totalorder %s34, 0
    %p229 = por %p227, %p228
    %s231 = sadd.s32 %s230, 1
    %p234 = scmp.eq.s32.totalorder %s28, 1
    %p235 = scmp.ne.s32.totalorder %s230, %s232
    %p236 = scmp.eq.s32.totalorder %s28, 0
    %p237 = por %p235, %p236
    %p238 = scmp.ne.s32.totalorder %s230, %s232
    %p239 = scmp.eq.s32.totalorder %s33, 1
    %p240 = por %p238, %p239
    %p241 = scmp.ne.s32.totalorder %s232, %s233
    %p242 = scmp.eq.s32.totalorder %s33, 0
    %p243 = por %p241, %p242
    %p244 = scmp.ne.s32.totalorder %s232, %s233
    %p245 = scmp.eq.s32.totalorder %s34, 1
    %p246 = por %p244, %p245
    %p248 = scmp.ne.s32.totalorder %s233, %s247
    %p249 = scmp.eq.s32.totalorder %s34, 0
    %p250 = por %p248, %p249
    %s252 = sadd.s32 %s251, 1
    %p255 = scmp.eq.s32.totalorder %s28, 1
    %p256 = scmp.ne.s32.totalorder %s251, %s253
    %p257 = scmp.eq.s32.totalorder %s28, 0
    %p258 = por %p256, %p257
    %p259 = scmp.ne.s32.totalorder %s251, %s253
    %p260 = scmp.eq.s32.totalorder %s33, 1
    %p261 = por %p259, %p260
    %p262 = scmp.ne.s32.totalorder %s253, %s254
    %p263 = scmp.eq.s32.totalorder %s33, 0
    %p264 = por %p262, %p263
    %p265 = scmp.ne.s32.totalorder %s253, %s254
    %p266 = scmp.eq.s32.totalorder %s34, 1
    %p267 = por %p265, %p266
    %p269 = scmp.ne.s32.totalorder %s254, %s268
    %p270 = scmp.eq.s32.totalorder %s34, 0
    %p271 = por %p269, %p270
    %s273 = sadd.s32 %s272, 1
    %p276 = scmp.eq.s32.totalorder %s28, 1
    %p277 = scmp.ne.s32.totalorder %s272, %s274
    %p278 = scmp.eq.s32.totalorder %s28, 0
    %p279 = por %p277, %p278
    %p280 = scmp.ne.s32.totalorder %s272, %s274
    %p281 = scmp.eq.s32.totalorder %s33, 1
    %p282 = por %p280, %p281
    %p283 = scmp.ne.s32.totalorder %s274, %s275
    %p284 = scmp.eq.s32.totalorder %s33, 0
    %p285 = por %p283, %p284
    %p286 = scmp.ne.s32.totalorder %s274, %s275
    %p287 = scmp.eq.s32.totalorder %s34, 1
    %p288 = por %p286, %p287
    %p290 = scmp.ne.s32.totalorder %s275, %s289
    %p291 = scmp.eq.s32.totalorder %s34, 0
    %p292 = por %p290, %p291
    %s294 = sadd.s32 %s293, 1
    %p297 = scmp.eq.s32.totalorder %s28, 1
    %p298 = scmp.ne.s32.totalorder %s293, %s295
    %p299 = scmp.eq.s32.totalorder %s28, 0
    %p300 = por %p298, %p299
    %p301 = scmp.ne.s32.totalorder %s293, %s295
    %p302 = scmp.eq.s32.totalorder %s33, 1
    %p303 = por %p301, %p302
    %p304 = scmp.ne.s32.totalorder %s295, %s296
    %p305 = scmp.eq.s32.totalorder %s33, 0
    %p306 = por %p304, %p305
    %p307 = scmp.ne.s32.totalorder %s295, %s296
    %p308 = scmp.eq.s32.totalorder %s34, 1
    %p309 = por %p307, %p308
    %p311 = scmp.ne.s32.totalorder %s296, %s310
    %p312 = scmp.eq.s32.totalorder %s34, 0
    %p313 = por %p311, %p312
    %s315 = sadd.s32 %s314, 1
    %p318 = scmp.eq.s32.totalorder %s28, 1
    %p319 = scmp.ne.s32.totalorder %s314, %s316
    %p320 = scmp.eq.s32.totalorder %s28, 0
    %p321 = por %p319, %p320
    %p322 = scmp.ne.s32.totalorder %s314, %s316
    %p323 = scmp.eq.s32.totalorder %s33, 1
    %p324 = por %p322, %p323
    %p325 = scmp.ne.s32.totalorder %s316, %s317
    %p326 = scmp.eq.s32.totalorder %s33, 0
    %p327 = por %p325, %p326
    %p328 = scmp.ne.s32.totalorder %s316, %s317
    %p329 = scmp.eq.s32.totalorder %s34, 1
    %p330 = por %p328, %p329
    %p332 = scmp.ne.s32.totalorder %s317, %s331
    %p333 = scmp.eq.s32.totalorder %s34, 0
    %p334 = por %p332, %p333
    %s336 = sadd.s32 %s335, 1
    %p339 = scmp.eq.s32.totalorder %s28, 1
    %p340 = scmp.ne.s32.totalorder %s335, %s337
    %p341 = scmp.eq.s32.totalorder %s28, 0
    %p342 = por %p340, %p341
    %p343 = scmp.ne.s32.totalorder %s335, %s337
    %p344 = scmp.eq.s32.totalorder %s33, 1
    %p345 = por %p343, %p344
    %p346 = scmp.ne.s32.totalorder %s337, %s338
    %p347 = scmp.eq.s32.totalorder %s33, 0
    %p348 = por %p346, %p347
    %p349 = scmp.ne.s32.totalorder %s337, %s338
    %p350 = scmp.eq.s32.totalorder %s34, 1
    %p351 = por %p349, %p350
    %p353 = scmp.ne.s32.totalorder %s338, %s352
    %p354 = scmp.eq.s32.totalorder %s34, 0
    %p355 = por %p353, %p354
    %s357 = sadd.s32 %s356, 1
    %p360 = scmp.eq.s32.totalorder %s28, 1
    %p361 = scmp.ne.s32.totalorder %s356, %s358
    %p362 = scmp.eq.s32.totalorder %s28, 0
    %p363 = por %p361, %p362
    %p364 = scmp.ne.s32.totalorder %s356, %s358
    %p365 = scmp.eq.s32.totalorder %s33, 1
    %p366 = por %p364, %p365
    %p367 = scmp.ne.s32.totalorder %s358, %s359
    %p368 = scmp.eq.s32.totalorder %s33, 0
    %p369 = por %p367, %p368
    %p370 = scmp.ne.s32.totalorder %s358, %s359
    %p371 = scmp.eq.s32.totalorder %s34, 1
    %p372 = por %p370, %p371
    %p374 = scmp.ne.s32.totalorder %s359, %s373
    %p375 = scmp.eq.s32.totalorder %s34, 0
    %p376 = por %p374, %p375
    %s378 = sadd.s32 %s377, 1
    %p381 = scmp.eq.s32.totalorder %s28, 1
    %p382 = scmp.ne.s32.totalorder %s377, %s379
    %p383 = scmp.eq.s32.totalorder %s28, 0
    %p384 = por %p382, %p383
    %p385 = scmp.ne.s32.totalorder %s377, %s379
    %p386 = scmp.eq.s32.totalorder %s33, 1
    %p387 = por %p385, %p386
    %p388 = scmp.ne.s32.totalorder %s379, %s380
    %p389 = scmp.eq.s32.totalorder %s33, 0
    %p390 = por %p388, %p389
    %p391 = scmp.ne.s32.totalorder %s379, %s380
    %p392 = scmp.eq.s32.totalorder %s34, 1
    %p393 = por %p391, %p392
    %p395 = scmp.ne.s32.totalorder %s380, %s394
    %p396 = scmp.eq.s32.totalorder %s34, 0
    %p397 = por %p395, %p396
    %s399 = sadd.s32 %s398, 1
    %p402 = scmp.eq.s32.totalorder %s28, 1
    %p403 = scmp.ne.s32.totalorder %s398, %s400
    %p404 = scmp.eq.s32.totalorder %s28, 0
    %p405 = por %p403, %p404
    %p406 = scmp.ne.s32.totalorder %s398, %s400
    %p407 = scmp.eq.s32.totalorder %s33, 1
    %p408 = por %p406, %p407
    %p409 = scmp.ne.s32.totalorder %s400, %s401
    %p410 = scmp.eq.s32.totalorder %s33, 0
    %p411 = por %p409, %p410
    %p412 = scmp.ne.s32.totalorder %s400, %s401
    %p413 = scmp.eq.s32.totalorder %s34, 1
    %p414 = por %p412, %p413
    %p416 = scmp.ne.s32.totalorder %s401, %s415
    %p417 = scmp.eq.s32.totalorder %s34, 0
    %p418 = por %p416, %p417
    %s420 = sadd.s32 %s419, 1
    %p423 = scmp.eq.s32.totalorder %s28, 1
    %p424 = scmp.ne.s32.totalorder %s419, %s421
    %p425 = scmp.eq.s32.totalorder %s28, 0
    %p426 = por %p424, %p425
    %p427 = scmp.ne.s32.totalorder %s419, %s421
    %p428 = scmp.eq.s32.totalorder %s33, 1
    %p429 = por %p427, %p428
    %p430 = scmp.ne.s32.totalorder %s421, %s422
    %p431 = scmp.eq.s32.totalorder %s33, 0
    %p432 = por %p430, %p431
    %p433 = scmp.ne.s32.totalorder %s421, %s422
    %p434 = scmp.eq.s32.totalorder %s34, 1
    %p435 = por %p433, %p434
    %p437 = scmp.ne.s32.totalorder %s422, %s436
    %p438 = scmp.eq.s32.totalorder %s34, 0
    %p439 = por %p437, %p438
    %s441 = sadd.s32 %s440, 1
    %p444 = scmp.eq.s32.totalorder %s28, 1
    %p445 = scmp.ne.s32.totalorder %s440, %s442
    %p446 = scmp.eq.s32.totalorder %s28, 0
    %p447 = por %p445, %p446
    %p448 = scmp.ne.s32.totalorder %s440, %s442
    %p449 = scmp.eq.s32.totalorder %s33, 1
    %p450 = por %p448, %p449
    %p451 = scmp.ne.s32.totalorder %s442, %s443
    %p452 = scmp.eq.s32.totalorder %s33, 0
    %p453 = por %p451, %p452
    %p454 = scmp.ne.s32.totalorder %s442, %s443
    %p455 = scmp.eq.s32.totalorder %s34, 1
    %p456 = por %p454, %p455
    %p458 = scmp.ne.s32.totalorder %s443, %s457
    %p459 = scmp.eq.s32.totalorder %s34, 0
    %p460 = por %p458, %p459
    %s461 = ssub.s32 %s28, %s35
    %p462 = scmp.eq.s32.totalorder %s461, 0
    %s464 = sadd.s32 %s463, 1
    %s465 = scalar_select %p462, %s463, %s464
    %p468 = pneg %p462
    %p469 = scmp.eq.s32.totalorder %s28, 1
    %p470 = por %p468, %p469
    %p471 = scmp.ne.s32.totalorder %s463, %s466
    %p472 = scmp.eq.s32.totalorder %s28, 0
    %p473 = por %p471, %p472
    %p474 = scmp.ne.s32.totalorder %s463, %s466
    %p475 = scmp.eq.s32.totalorder %s33, 1
    %p476 = por %p474, %p475
    %p477 = scmp.ne.s32.totalorder %s466, %s467
    %p478 = scmp.eq.s32.totalorder %s33, 0
    %p479 = por %p477, %p478
    %p480 = scmp.ne.s32.totalorder %s466, %s467
    %p481 = scmp.eq.s32.totalorder %s34, 1
    %p482 = por %p480, %p481
    %p484 = scmp.ne.s32.totalorder %s467, %s483
    %p485 = scmp.eq.s32.totalorder %s34, 0
    %p486 = por %p484, %p485
    %s487 = ssub.s32 %s28, %s35
    %p488 = scmp.eq.s32.totalorder %s487, 0
    %s490 = sadd.s32 %s489, 1
    %s491 = scalar_select %p488, %s489, %s490
    %p494 = pneg %p488
    %p495 = scmp.eq.s32.totalorder %s28, 1
    %p496 = por %p494, %p495
    %p497 = scmp.ne.s32.totalorder %s489, %s492
    %p498 = scmp.eq.s32.totalorder %s28, 0
    %p499 = por %p497, %p498
    %p500 = scmp.ne.s32.totalorder %s489, %s492
    %p501 = scmp.eq.s32.totalorder %s33, 1
    %p502 = por %p500, %p501
    %p503 = scmp.ne.s32.totalorder %s492, %s493
    %p504 = scmp.eq.s32.totalorder %s33, 0
    %p505 = por %p503, %p504
    %p506 = scmp.ne.s32.totalorder %s492, %s493
    %p507 = scmp.eq.s32.totalorder %s34, 1
    %p508 = por %p506, %p507
    %p510 = scmp.ne.s32.totalorder %s493, %s509
    %p511 = scmp.eq.s32.totalorder %s34, 0
    %p512 = por %p510, %p511
    %p513 = scmp.le.s32.totalorder 1, %s28
    %p514 = scmp.lt.s32.totalorder %s28, 3
    %p515 = pnand %p513, %p514
    %p516 = pneg %p515
    // Predicated region
    $region9: #{dcan_forward.1} parent=5 // pred_check
      _
    $region10: #{dcan_forward.1} parent=5 // pred_check_branch
      %518 = sbr.rel (%p515) target = $region12
    $region11: #{dcan_forward.1} parent=5 // pred_region
      %s519 = ssub.s32 %s28, 1
      // Predicated region
      $region13: #{dcan_forward.1} parent=11 // pred_check
        %p520 = pneg %p75
      $region14: #{dcan_forward.1} parent=11 // pred_check_branch
        %522 = sbr.rel (%p520) target = $region16
      $region15: #{dcan_forward.1} parent=11 // pred_region
        _
      $region16: #{dcan_forward.1} parent=11 // pred_fallthru
        _
      // Predicated region
      $region17: #{dcan_forward.1} parent=11 // pred_check
        %p523 = pneg %p96
      $region18: #{dcan_forward.1} parent=11 // pred_check_branch
        %525 = sbr.rel (%p523) target = $region20
      $region19: #{dcan_forward.1} parent=11 // pred_region
        _
      $region20: #{dcan_forward.1} parent=11 // pred_fallthru
        _
      // Predicated region
      $region21: #{dcan_forward.1} parent=11 // pred_check
        %p526 = pneg %p117
      $region22: #{dcan_forward.1} parent=11 // pred_check_branch
        %528 = sbr.rel (%p526) target = $region24
      $region23: #{dcan_forward.1} parent=11 // pred_region
        _
      $region24: #{dcan_forward.1} parent=11 // pred_fallthru
        _
      // Predicated region
      $region25: #{dcan_forward.1} parent=11 // pred_check
        %p529 = pneg %p138
      $region26: #{dcan_forward.1} parent=11 // pred_check_branch
        %531 = sbr.rel (%p529) target = $region28
      $region27: #{dcan_forward.1} parent=11 // pred_region
        _
      $region28: #{dcan_forward.1} parent=11 // pred_fallthru
        _
      // Predicated region
      $region29: #{dcan_forward.1} parent=11 // pred_check
        %p532 = pneg %p159
      $region30: #{dcan_forward.1} parent=11 // pred_check_branch
        %534 = sbr.rel (%p532) target = $region32
      $region31: #{dcan_forward.1} parent=11 // pred_region
        _
      $region32: #{dcan_forward.1} parent=11 // pred_fallthru
        _
      // Predicated region
      $region33: #{dcan_forward.1} parent=11 // pred_check
        %p535 = pneg %p180
      $region34: #{dcan_forward.1} parent=11 // pred_check_branch
        %537 = sbr.rel (%p535) target = $region36
      $region35: #{dcan_forward.1} parent=11 // pred_region
        _
      $region36: #{dcan_forward.1} parent=11 // pred_fallthru
        _
      // Predicated region
      $region37: #{dcan_forward.1} parent=11 // pred_check
        %p538 = pneg %p201
      $region38: #{dcan_forward.1} parent=11 // pred_check_branch
        %540 = sbr.rel (%p538) target = $region40
      $region39: #{dcan_forward.1} parent=11 // pred_region
        _
      $region40: #{dcan_forward.1} parent=11 // pred_fallthru
        _
      // Predicated region
      $region41: #{dcan_forward.1} parent=11 // pred_check
        %p541 = pneg %p222
      $region42: #{dcan_forward.1} parent=11 // pred_check_branch
        %543 = sbr.rel (%p541) target = $region44
      $region43: #{dcan_forward.1} parent=11 // pred_region
        _
      $region44: #{dcan_forward.1} parent=11 // pred_fallthru
        _
      // Predicated region
      $region45: #{dcan_forward.1} parent=11 // pred_check
        %p544 = pneg %p243
      $region46: #{dcan_forward.1} parent=11 // pred_check_branch
        %546 = sbr.rel (%p544) target = $region48
      $region47: #{dcan_forward.1} parent=11 // pred_region
        _
      $region48: #{dcan_forward.1} parent=11 // pred_fallthru
        _
      // Predicated region
      $region49: #{dcan_forward.1} parent=11 // pred_check
        %p547 = pneg %p264
      $region50: #{dcan_forward.1} parent=11 // pred_check_branch
        %549 = sbr.rel (%p547) target = $region52
      $region51: #{dcan_forward.1} parent=11 // pred_region
        _
      $region52: #{dcan_forward.1} parent=11 // pred_fallthru
        _
      // Predicated region
      $region53: #{dcan_forward.1} parent=11 // pred_check
        %p550 = pneg %p285
      $region54: #{dcan_forward.1} parent=11 // pred_check_branch
        %552 = sbr.rel (%p550) target = $region56
      $region55: #{dcan_forward.1} parent=11 // pred_region
        _
      $region56: #{dcan_forward.1} parent=11 // pred_fallthru
        _
      // Predicated region
      $region57: #{dcan_forward.1} parent=11 // pred_check
        %p553 = pneg %p306
      $region58: #{dcan_forward.1} parent=11 // pred_check_branch
        %555 = sbr.rel (%p553) target = $region60
      $region59: #{dcan_forward.1} parent=11 // pred_region
        _
      $region60: #{dcan_forward.1} parent=11 // pred_fallthru
        _
      // Predicated region
      $region61: #{dcan_forward.1} parent=11 // pred_check
        %p556 = pneg %p327
      $region62: #{dcan_forward.1} parent=11 // pred_check_branch
        %558 = sbr.rel (%p556) target = $region64
      $region63: #{dcan_forward.1} parent=11 // pred_region
        _
      $region64: #{dcan_forward.1} parent=11 // pred_fallthru
        _
      // Predicated region
      $region65: #{dcan_forward.1} parent=11 // pred_check
        %p559 = pneg %p348
      $region66: #{dcan_forward.1} parent=11 // pred_check_branch
        %561 = sbr.rel (%p559) target = $region68
      $region67: #{dcan_forward.1} parent=11 // pred_region
        _
      $region68: #{dcan_forward.1} parent=11 // pred_fallthru
        _
      // Predicated region
      $region69: #{dcan_forward.1} parent=11 // pred_check
        %p562 = pneg %p369
      $region70: #{dcan_forward.1} parent=11 // pred_check_branch
        %564 = sbr.rel (%p562) target = $region72
      $region71: #{dcan_forward.1} parent=11 // pred_region
        _
      $region72: #{dcan_forward.1} parent=11 // pred_fallthru
        _
      // Predicated region
      $region73: #{dcan_forward.1} parent=11 // pred_check
        %p565 = pneg %p390
      $region74: #{dcan_forward.1} parent=11 // pred_check_branch
        %567 = sbr.rel (%p565) target = $region76
      $region75: #{dcan_forward.1} parent=11 // pred_region
        _
      $region76: #{dcan_forward.1} parent=11 // pred_fallthru
        _
      // Predicated region
      $region77: #{dcan_forward.1} parent=11 // pred_check
        %p568 = pneg %p411
      $region78: #{dcan_forward.1} parent=11 // pred_check_branch
        %570 = sbr.rel (%p568) target = $region80
      $region79: #{dcan_forward.1} parent=11 // pred_region
        _
      $region80: #{dcan_forward.1} parent=11 // pred_fallthru
        _
      // Predicated region
      $region81: #{dcan_forward.1} parent=11 // pred_check
        %p571 = pneg %p432
      $region82: #{dcan_forward.1} parent=11 // pred_check_branch
        %573 = sbr.rel (%p571) target = $region84
      $region83: #{dcan_forward.1} parent=11 // pred_region
        _
      $region84: #{dcan_forward.1} parent=11 // pred_fallthru
        _
      // Predicated region
      $region85: #{dcan_forward.1} parent=11 // pred_check
        %p574 = pneg %p453
      $region86: #{dcan_forward.1} parent=11 // pred_check_branch
        %576 = sbr.rel (%p574) target = $region88
      $region87: #{dcan_forward.1} parent=11 // pred_region
        _
      $region88: #{dcan_forward.1} parent=11 // pred_fallthru
        _
    $region12: #{dcan_forward.1} parent=5 // pred_fallthru
      _
    %p577 = scmp.lt.s32.totalorder %s28, 2
    // Predicated region
    $region89: #{dcan_forward.1} parent=5 // pred_check
      %p578 = pneg %p577
    $region90: #{dcan_forward.1} parent=5 // pred_check_branch
      %580 = sbr.rel (%p578) target = $region92
    $region91: #{dcan_forward.1} parent=5 // pred_region
      // Predicated region
      $region93: #{dcan_forward.1} parent=91 // pred_check
        %p581 = pneg %p48
      $region94: #{dcan_forward.1} parent=91 // pred_check_branch
        %583 = sbr.rel (%p581) target = $region96
      $region95: #{dcan_forward.1} parent=91 // pred_region
        %p584 = scmp.lt.s32.totalorder %s28, 1
        %s585 = scalar_select %p584, %s28, 1
        %s586 = smul.addr %s585, 2
        %s587 = smul.addr %s586, 8
        %s588 = scalar_lea.vmem %s0, %s587
      $region96: #{dcan_forward.1} parent=91 // pred_fallthru
        _
    $region92: #{dcan_forward.1} parent=5 // pred_fallthru
      _
    %p589 = scmp.le.s32.totalorder 1, %s28
    %p590 = scmp.lt.s32.totalorder %s28, 3
    %p591 = pnand %p589, %p590
    %p592 = pneg %p591
    // Predicated region
    $region97: #{dcan_forward.1} parent=5 // pred_check
      _
    $region98: #{dcan_forward.1} parent=5 // pred_check_branch
      %594 = sbr.rel (%p591) target = $region100
    $region99: #{dcan_forward.1} parent=5 // pred_region
      %s595 = ssub.s32 %s28, 1
      %p596 = scmp.lt.s32.totalorder %s33, 1
      %s597 = scalar_select %p596, %s33, 1
      %s598 = smul.addr %s597, 2
      %s599 = smul.addr %s598, 8
      %s600 = scalar_lea.vmem %s0, %s599
      %p601 = pneg %p54
      %p602 = pneg %p51
      %p603 = pneg %p75
      %p604 = pneg %p72
      %p605 = pneg %p96
      %p606 = pneg %p93
      %p607 = pneg %p117
      %p608 = pneg %p114
      %p609 = pneg %p138
      %p610 = pneg %p135
      %p611 = pneg %p159
      %p612 = pneg %p156
      %p613 = pneg %p180
      %p614 = pneg %p177
      %p615 = pneg %p201
      %p616 = pneg %p198
      %p617 = pneg %p222
      %p618 = pneg %p219
      %p619 = pneg %p243
      %p620 = pneg %p240
      %p621 = pneg %p264
      %p622 = pneg %p261
      %p623 = pneg %p285
      %p624 = pneg %p282
      %p625 = pneg %p306
      %p626 = pneg %p303
      %p627 = pneg %p327
      %p628 = pneg %p324
      %p629 = pneg %p348
      %p630 = pneg %p345
      %p631 = pneg %p369
      %p632 = pneg %p366
      %p633 = pneg %p390
      %p634 = pneg %p387
      %p635 = pneg %p411
      %p636 = pneg %p408
      %p637 = pneg %p432
      %p638 = pneg %p429
      %p639 = pneg %p453
      %p640 = pneg %p450
      %p641 = pneg %p479
      %p642 = pneg %p476
      %p643 = scmp.lt.s32.totalorder %s33, 1
      %s644 = scalar_select %p643, %s33, 1
      %s645 = smul.addr %s644, 4
      %s646 = scalar_lea.vmem %s20, %s645
      %p647 = pneg %p505
      %p648 = pneg %p502
      %p649 = scmp.lt.s32.totalorder %s33, 1
      %s650 = scalar_select %p649, %s33, 1
      %s651 = smul.addr %s650, 2
      %s652 = smul.addr %s651, 2
      %s653 = scalar_lea.vmem %s21, %s652
      %p654 = scmp.lt.s32.totalorder %s33, 1
      %s655 = scalar_select %p654, %s33, 1
      %s656 = smul.addr %s655, 2
      %s657 = smul.addr %s656, 8
      %s658 = scalar_lea.vmem %s0, %s657
      %p659 = scmp.lt.s32.totalorder %s33, 1
      %s660 = scalar_select %p659, %s33, 1
      %s661 = smul.addr %s660, 4
      %s662 = scalar_lea.vmem %s20, %s661
      %p663 = scmp.lt.s32.totalorder %s33, 1
      %s664 = scalar_select %p663, %s33, 1
      %s665 = smul.addr %s664, 2
      %s666 = smul.addr %s665, 2
      %s667 = scalar_lea.vmem %s21, %s666
      %v669 = vld [vmem:[%s658] sm:$0xff]
      %v670 = vld [vmem:[%s658 + $0x8] sm:$0xff]
      %v671 = vpack.c.bf16 %v670, %v669
      %v672 = vld [vmem:[%s1] sm:$0xf]
      %v673 = vld [vmem:[%s1 + $0x4] sm:$0xf]
      %v674 = vld [vmem:[%s1 + $0x8] sm:$0xf]
      %v675 = vld [vmem:[%s1 + $0xc] sm:$0xf]
      %v676 = vld [vmem:[%s2] sm:$0xff]
      %v677 = vld [vmem:[%s2 + $0x8] sm:$0xff]
      %v678 = vld [vmem:[%s2 + $0x10] sm:$0xff]
      %v679 = vld [vmem:[%s2 + $0x18] sm:$0xff]
      %681 = vset.pattern.permute.xlu0 0
      %682 = vperm.xlu0 %681, %v676
      %v683 = vpop.permute.xlu0 %682
      %686 = vset.pattern.permute.xlu0 0
      %687 = vperm.xlu0 %686, %v677
      %v688 = vpop.permute.xlu0 %687
      %691 = vset.pattern.permute.xlu0 0
      %692 = vperm.xlu0 %691, %v678
      %v693 = vpop.permute.xlu0 %692
      %696 = vset.pattern.permute.xlu0 0
      %697 = vperm.xlu0 %696, %v679
      %v698 = vpop.permute.xlu0 %697
      %v704 = vunpack.c.l.b16 %v672
      %v705 = vunpack.c.l.b16 %v673
      %v706 = vunpack.c.l.b16 %v674
      %v707 = vunpack.c.l.b16 %v675
      %v708 = vpack.c.b16 %v705, %v704
      %v709 = vpack.c.b16 %v707, %v706
      %vm710 = vcmask 130048
      %v712 = vsel %vm710, %v708, 0
      %v715 = vsel %vm710, %v709, 0
      %717 = vmatprep.subr.bf16.mxu0 0
      %718 = vmatpush1.bf16.msra.mxu0 %v671
      %719 = vmatprep.subr.bf16.mxu0 0
      %720 = vmatpush1.bf16.msra.mxu0 0
      %721 = vmatprep.subr.bf16.mxu0 0
      %722 = vmatpush1.bf16.msra.mxu0 0
      %723 = vmatprep.subr.bf16.mxu0 0
      %724 = vmatpush1.bf16.msra.mxu0 0
      %725 = vmatprep.subr.bf16.mxu0 0
      %726 = vmatpush1.bf16.msra.mxu0 0
      %727 = vmatprep.subr.bf16.mxu0 0
      %728 = vmatpush1.bf16.msra.mxu0 0
      %729 = vmatprep.subr.bf16.mxu0 0
      %730 = vmatpush1.bf16.msra.mxu0 0
      %731 = vmatprep.subr.bf16.mxu0 0
      %732 = vmatpush1.bf16.msra.mxu0 0
      %733 = vmatprep.subr.bf16.mxu0 0
      %734 = vmatpush1.bf16.msra.mxu0 0
      %735 = vmatprep.subr.bf16.mxu0 0
      %736 = vmatpush1.bf16.msra.mxu0 0
      %737 = vmatprep.subr.bf16.mxu0 0
      %738 = vmatpush1.bf16.msra.mxu0 0
      %739 = vmatprep.subr.bf16.mxu0 0
      %740 = vmatpush1.bf16.msra.mxu0 0
      %741 = vmatprep.subr.bf16.mxu0 0
      %742 = vmatpush1.bf16.msra.mxu0 0
      %743 = vmatprep.subr.bf16.mxu0 0
      %744 = vmatpush1.bf16.msra.mxu0 0
      %745 = vmatprep.subr.bf16.mxu0 0
      %746 = vmatpush1.bf16.msra.mxu0 0
      %747 = vmatprep.subr.bf16.mxu0 0
      %748 = vmatpush1.bf16.msra.mxu0 0
      %749 = vmatprep.mubr.bf16.mxu0 0
      %750 = vmatmul.mubr.bf16.gmra.mrb[0].mxu0 %v712
      %v751 = vpop.f32.mrb[0].mxu0
      %v752 = vadd.f32 %v683, %v751
      %v753 = vpop.f32.mrb[0].mxu0
      %v754 = vpop.f32.mrb[0].mxu0
      %v755 = vadd.f32 %v688, %v754
      %v756 = vpop.f32.mrb[0].mxu0
      %757 = vmatprep.mubr.bf16.mxu0 0
      %758 = vmatmul.mubr.bf16.gmra.mrb[0].mxu0 %v715
      %v759 = vpop.f32.mrb[0].mxu0
      %v760 = vadd.f32 %v693, %v759
      %v761 = vpop.f32.mrb[0].mxu0
      %v762 = vpop.f32.mrb[0].mxu0
      %v763 = vadd.f32 %v698, %v762
      %v764 = vpop.f32.mrb[0].mxu0
      %765 = vdwg.mxu0
      %v766 = vmax.f32 %v752, 0.0
      %v767 = vmax.f32 %v755, 0.0
      %v768 = vmax.f32 %v760, 0.0
      %v769 = vmax.f32 %v763, 0.0
      %v770 = vpack.c.bf16 %v767, %v766
      %v771 = vpack.c.bf16 %v769, %v768
      %774 = vrot.lane.b32.xlu0 %v770, 2
      %v775 = vpop.permute.xlu0 %774
      %776 = vrot.lane.b32.xlu0 %v771, 2
      %v777 = vpop.permute.xlu0 %776
      %vm778 = vcmask 15360
      %v781 = vsel %vm778, 0, %v775
      %v783 = vsel %vm778, 0, %v777
      %vm784 = vcmask 146432
      %v785 = vsel %vm784, %v781, 0
      %v787 = vsel %vm784, %v783, 0
      %v789 = vunpack.c.l.bf16 %v770
      %v790 = vunpack.c.h.bf16 %v770
      %v791 = vunpack.c.l.bf16 %v771
      %v792 = vunpack.c.h.bf16 %v771
      %v793 = vld [vmem:[%s3] sm:$0xf]
      %v794 = vld [vmem:[%s3 + $0x4] sm:$0xf]
      %v795 = vld [vmem:[%s3 + $0x8] sm:$0xf]
      %v796 = vld [vmem:[%s3 + $0xc] sm:$0xf]
      %v797 = vld [vmem:[%s4] sm:$0xff]
      %v798 = vld [vmem:[%s4 + $0x8] sm:$0xff]
      %v799 = vld [vmem:[%s4 + $0x10] sm:$0xff]
      %v800 = vld [vmem:[%s4 + $0x18] sm:$0xff]
      %803 = vrot.lane.b32.xlu0 %v785, 126
      %v804 = vpop.permute.xlu0 %803
      %805 = vrot.lane.b32.xlu0 %v787, 126
      %v806 = vpop.permute.xlu0 %805
      %809 = vrot.lane.b32.xlu0 %v785, 124
      %v810 = vpop.permute.xlu0 %809
      %811 = vrot.lane.b32.xlu0 %v787, 124
      %v812 = vpop.permute.xlu0 %811
      %816 = vset.pattern.permute.xlu0 0
      %817 = vperm.xlu0 %816, %v797
      %v818 = vpop.permute.xlu0 %817
      %821 = vset.pattern.permute.xlu0 0
      %822 = vperm.xlu0 %821, %v798
      %v823 = vpop.permute.xlu0 %822
      %826 = vset.pattern.permute.xlu0 0
      %827 = vperm.xlu0 %826, %v799
      %v828 = vpop.permute.xlu0 %827
      %831 = vset.pattern.permute.xlu0 0
      %832 = vperm.xlu0 %831, %v800
      %v833 = vpop.permute.xlu0 %832
      %v839 = vunpack.c.l.b16 %v793
      %v840 = vunpack.c.l.b16 %v794
      %v841 = vunpack.c.l.b16 %v795
      %v842 = vunpack.c.l.b16 %v796
      %v843 = vpack.c.b16 %v840, %v839
      %v844 = vpack.c.b16 %v842, %v841
      %vm845 = vcmask 785408
      %v847 = vsel %vm845, %v843, 0
      %v850 = vsel %vm845, %v844, 0
      %852 = vmatprep.subr.bf16.mxu0 0
      %853 = vmatpush1.bf16.msra.mxu0 %v785
      %854 = vmatprep.subr.bf16.mxu0 0
      %855 = vmatpush1.bf16.msra.mxu0 %v787
      %856 = vmatprep.subr.bf16.mxu0 0
      %857 = vmatpush1.bf16.msra.mxu0 %v804
      %858 = vmatprep.subr.bf16.mxu0 0
      %859 = vmatpush1.bf16.msra.mxu0 %v806
      %860 = vmatprep.subr.bf16.mxu0 0
      %861 = vmatpush1.bf16.msra.mxu0 %v810
      %862 = vmatprep.subr.bf16.mxu0 0
      %863 = vmatpush1.bf16.msra.mxu0 %v812
      %864 = vmatprep.subr.bf16.mxu0 0
      %865 = vmatpush1.bf16.msra.mxu0 0
      %866 = vmatprep.subr.bf16.mxu0 0
      %867 = vmatpush1.bf16.msra.mxu0 0
      %868 = vmatprep.subr.bf16.mxu0 0
      %869 = vmatpush1.bf16.msra.mxu0 0
      %870 = vmatprep.subr.bf16.mxu0 0
      %871 = vmatpush1.bf16.msra.mxu0 0
      %872 = vmatprep.subr.bf16.mxu0 0
      %873 = vmatpush1.bf16.msra.mxu0 0
      %874 = vmatprep.subr.bf16.mxu0 0
      %875 = vmatpush1.bf16.msra.mxu0 0
      %876 = vmatprep.subr.bf16.mxu0 0
      %877 = vmatpush1.bf16.msra.mxu0 0
      %878 = vmatprep.subr.bf16.mxu0 0
      %879 = vmatpush1.bf16.msra.mxu0 0
      %880 = vmatprep.subr.bf16.mxu0 0
      %881 = vmatpush1.bf16.msra.mxu0 0
      %882 = vmatprep.subr.bf16.mxu0 0
      %883 = vmatpush1.bf16.msra.mxu0 0
      %884 = vmatprep.mubr.bf16.mxu0 0
      %885 = vmatmul.mubr.bf16.gmra.mrb[0].mxu0 %v847
      %v886 = vpop.f32.mrb[0].mxu0
      %v887 = vadd.f32 %v818, %v886
      %v888 = vpop.f32.mrb[0].mxu0
      %v889 = vpop.f32.mrb[0].mxu0
      %v890 = vadd.f32 %v823, %v889
      %v891 = vpop.f32.mrb[0].mxu0
      %892 = vmatprep.mubr.bf16.mxu0 0
      %893 = vmatmul.mubr.bf16.gmra.mrb[0].mxu0 %v850
      %v894 = vpop.f32.mrb[0].mxu0
      %v895 = vadd.f32 %v828, %v894
      %v896 = vpop.f32.mrb[0].mxu0
      %v897 = vpop.f32.mrb[0].mxu0
      %v898 = vadd.f32 %v833, %v897
      %v899 = vpop.f32.mrb[0].mxu0
      %900 = vdwg.mxu0
      %v901 = vadd.f32 %v789, %v887
      %v902 = vadd.f32 %v790, %v890
      %v903 = vadd.f32 %v791, %v895
      %v904 = vadd.f32 %v792, %v898
      %v905 = vmax.f32 %v901, 0.0
      %v906 = vmax.f32 %v902, 0.0
      %v907 = vmax.f32 %v903, 0.0
      %v908 = vmax.f32 %v904, 0.0
      %v909 = vpack.c.bf16 %v906, %v905
      %v910 = vpack.c.bf16 %v908, %v907
      %913 = vrot.lane.b32.xlu0 %v909, 4
      %v914 = vpop.permute.xlu0 %913
      %915 = vrot.lane.b32.xlu0 %v910, 4
      %v916 = vpop.permute.xlu0 %915
      %vm917 = vcmask 31744
      %v919 = vsel %vm917, 0, %v914
      %v921 = vsel %vm917, 0, %v916
      %vm922 = vcmask 162816
      %v923 = vsel %vm922, %v919, 0
      %v925 = vsel %vm922, %v921, 0
      %v927 = vunpack.c.l.bf16 %v909
      %v928 = vunpack.c.h.bf16 %v909
      %v929 = vunpack.c.l.bf16 %v910
      %v930 = vunpack.c.h.bf16 %v910
      %s931 = scalar_lea.vmem %s3, 16
      %v932 = vld [vmem:[%s931] sm:$0xf]
      %v933 = vld [vmem:[%s931 + $0x4] sm:$0xf]
      %v934 = vld [vmem:[%s931 + $0x8] sm:$0xf]
      %v935 = vld [vmem:[%s931 + $0xc] sm:$0xf]
      %s936 = scalar_lea.vmem %s4, 32
      %v937 = vld [vmem:[%s936] sm:$0xff]
      %v938 = vld [vmem:[%s936 + $0x8] sm:$0xff]
      %v939 = vld [vmem:[%s936 + $0x10] sm:$0xff]
      %v940 = vld [vmem:[%s936 + $0x18] sm:$0xff]
      %943 = vrot.lane.b32.xlu0 %v923, 124
      %v944 = vpop.permute.xlu0 %943
      %945 = vrot.lane.b32.xlu0 %v925, 124
      %v946 = vpop.permute.xlu0 %945
      %949 = vrot.lane.b32.xlu0 %v923, 120
      %v950 = vpop.permute.xlu0 %949
      %951 = vrot.lane.b32.xlu0 %v925, 120
      %v952 = vpop.permute.xlu0 %951
      %956 = vset.pattern.permute.xlu0 0
      %957 = vperm.xlu0 %956, %v937
      %v958 = vpop.permute.xlu0 %957
      %961 = vset.pattern.permute.xlu0 0
      %962 = vperm.xlu0 %961, %v938
      %v963 = vpop.permute.xlu0 %962
      %966 = vset.pattern.permute.xlu0 0
      %967 = vperm.xlu0 %966, %v939
      %v968 = vpop.permute.xlu0 %967
      %971 = vset.pattern.permute.xlu0 0
      %972 = vperm.xlu0 %971, %v940
      %v973 = vpop.permute.xlu0 %972
      %v979 = vunpack.c.l.b16 %v932
      %v980 = vunpack.c.l.b16 %v933
      %v981 = vunpack.c.l.b16 %v934
      %v982 = vunpack.c.l.b16 %v935
      %v983 = vpack.c.b16 %v980, %v979
      %v984 = vpack.c.b16 %v982, %v981
      %v986 = vsel %vm845, %v983, 0
      %v989 = vsel %vm845, %v984, 0
      %991 = vmatprep.subr.bf16.mxu0 0
      %992 = vmatpush1.bf16.msra.mxu0 %v923
      %993 = vmatprep.subr.bf16.mxu0 0
      %994 = vmatpush1.bf16.msra.mxu0 %v925
      %995 = vmatprep.subr.bf16.mxu0 0
      %996 = vmatpush1.bf16.msra.mxu0 %v944
      %997 = vmatprep.subr.bf16.mxu0 0
      %998 = vmatpush1.bf16.msra.mxu0 %v946
      %999 = vmatprep.subr.bf16.mxu0 0
      %1000 = vmatpush1.bf16.msra.mxu0 %v950
      %1001 = vmatprep.subr.bf16.mxu0 0
      %1002 = vmatpush1.bf16.msra.mxu0 %v952
      %1003 = vmatprep.subr.bf16.mxu0 0
      %1004 = vmatpush1.bf16.msra.mxu0 0
      %1005 = vmatprep.subr.bf16.mxu0 0
      %1006 = vmatpush1.bf16.msra.mxu0 0
      %1007 = vmatprep.subr.bf16.mxu0 0
      %1008 = vmatpush1.bf16.msra.mxu0 0
      %1009 = vmatprep.subr.bf16.mxu0 0
      %1010 = vmatpush1.bf16.msra.mxu0 0
      %1011 = vmatprep.subr.bf16.mxu0 0
      %1012 = vmatpush1.bf16.msra.mxu0 0
      %1013 = vmatprep.subr.bf16.mxu0 0
      %1014 = vmatpush1.bf16.msra.mxu0 0
      %1015 = vmatprep.subr.bf16.mxu0 0
      %1016 = vmatpush1.bf16.msra.mxu0 0
      %1017 = vmatprep.subr.bf16.mxu0 0
      %1018 = vmatpush1.bf16.msra.mxu0 0
      %1019 = vmatprep.subr.bf16.mxu0 0
      %1020 = vmatpush1.bf16.msra.mxu0 0
      %1021 = vmatprep.subr.bf16.mxu0 0
      %1022 = vmatpush1.bf16.msra.mxu0 0
      %1023 = vmatprep.mubr.bf16.mxu0 0
      %1024 = vmatmul.mubr.bf16.gmra.mrb[0].mxu0 %v986
      %v1025 = vpop.f32.mrb[0].mxu0
      %v1026 = vadd.f32 %v958, %v1025
      %v1027 = vpop.f32.mrb[0].mxu0
      %v1028 = vpop.f32.mrb[0].mxu0
      %v1029 = vadd.f32 %v963, %v1028
      %v1030 = vpop.f32.mrb[0].mxu0
      %1031 = vmatprep.mubr.bf16.mxu0 0
      %1032 = vmatmul.mubr.bf16.gmra.mrb[0].mxu0 %v989
      %v1033 = vpop.f32.mrb[0].mxu0
      %v1034 = vadd.f32 %v968, %v1033
      %v1035 = vpop.f32.mrb[0].mxu0
      %v1036 = vpop.f32.mrb[0].mxu0
      %v1037 = vadd.f32 %v973, %v1036
      %v1038 = vpop.f32.mrb[0].mxu0
      %1039 = vdwg.mxu0
      %v1040 = vadd.f32 %v927, %v1026
      %v1041 = vadd.f32 %v928, %v1029
      %v1042 = vadd.f32 %v929, %v1034
      %v1043 = vadd.f32 %v930, %v1037
      %v1044 = vmax.f32 %v1040, 0.0
      %v1045 = vmax.f32 %v1041, 0.0
      %v1046 = vmax.f32 %v1042, 0.0
      %v1047 = vmax.f32 %v1043, 0.0
      %v1048 = vpack.c.bf16 %v1045, %v1044
      %v1049 = vpack.c.bf16 %v1047, %v1046
      %1052 = vrot.lane.b32.xlu0 %v1048, 4
      %v1053 = vpop.permute.xlu0 %1052
      %1054 = vrot.lane.b32.xlu0 %v1049, 4
      %v1055 = vpop.permute.xlu0 %1054
      %v1057 = vsel %vm917, 0, %v1053
      %v1059 = vsel %vm917, 0, %v1055
      %v1060 = vsel %vm922, %v1057, 0
      %v1062 = vsel %vm922, %v1059, 0
      %1066 = vrot.lane.b32.xlu0 %v1060, 127
      %v1067 = vpop.permute.xlu0 %1066
      %1068 = vrot.lane.b32.xlu0 %v1062, 127
      %v1069 = vpop.permute.xlu0 %1068
      %1070 = vrot.lane.b32.xlu0 %v1060, 126
      %v1071 = vpop.permute.xlu0 %1070
      %1072 = vrot.lane.b32.xlu0 %v1062, 126
      %v1073 = vpop.permute.xlu0 %1072
      %v1074 = vld [vmem:[%s5] sm:$0xf]
      %v1075 = vld [vmem:[%s5 + $0x4] sm:$0xf]
      %v1076 = vld [vmem:[%s5 + $0x8] sm:$0xf]
      %v1077 = vld [vmem:[%s5 + $0xc] sm:$0xf]
      %v1078 = vld [vmem:[%s5 + $0x10] sm:$0xf]
      %v1079 = vld [vmem:[%s5 + $0x14] sm:$0xf]
      %v1080 = vld [vmem:[%s5 + $0x18] sm:$0xf]
      %v1081 = vld [vmem:[%s5 + $0x1c] sm:$0xf]
      %v1082 = vld [vmem:[%s5 + $0x20] sm:$0xf]
      %v1083 = vld [vmem:[%s5 + $0x24] sm:$0xf]
      %v1084 = vld [vmem:[%s5 + $0x28] sm:$0xf]
      %v1085 = vld [vmem:[%s5 + $0x2c] sm:$0xf]
      %v1086 = vld [vmem:[%s5 + $0x30] sm:$0xf]
      %v1087 = vld [vmem:[%s5 + $0x34] sm:$0xf]
      %v1088 = vld [vmem:[%s5 + $0x38] sm:$0xf]
      %v1089 = vld [vmem:[%s5 + $0x3c] sm:$0xf]
      %v1090 = vld [vmem:[%s6] sm:$0xff]
      %v1091 = vld [vmem:[%s6 + $0x8] sm:$0xff]
      %v1092 = vld [vmem:[%s6 + $0x10] sm:$0xff]
      %v1093 = vld [vmem:[%s6 + $0x18] sm:$0xff]
      %v1094 = vld [vmem:[%s6 + $0x20] sm:$0xff]
      %v1095 = vld [vmem:[%s6 + $0x28] sm:$0xff]
      %v1096 = vld [vmem:[%s6 + $0x30] sm:$0xff]
      %v1097 = vld [vmem:[%s6 + $0x38] sm:$0xff]
      %v1098 = vld [vmem:[%s6 + $0x40] sm:$0xff]
      %v1099 = vld [vmem:[%s6 + $0x48] sm:$0xff]
      %v1100 = vld [vmem:[%s6 + $0x50] sm:$0xff]
      %v1101 = vld [vmem:[%s6 + $0x58] sm:$0xff]
      %v1102 = vld [vmem:[%s6 + $0x60] sm:$0xff]
      %v1103 = vld [vmem:[%s6 + $0x68] sm:$0xff]
      %v1104 = vld [vmem:[%s6 + $0x70] sm:$0xff]
      %v1105 = vld [vmem:[%s6 + $0x78] sm:$0xff]
      %1107 = vset.pattern.permute.xlu0 0
      %1108 = vperm.xlu0 %1107, %v1090
      %v1109 = vpop.permute.xlu0 %1108
      %1112 = vset.pattern.permute.xlu0 0
      %1113 = vperm.xlu0 %1112, %v1091
      %v1114 = vpop.permute.xlu0 %1113
      %1117 = vset.pattern.permute.xlu0 0
      %1118 = vperm.xlu0 %1117, %v1092
      %v1119 = vpop.permute.xlu0 %1118
      %1122 = vset.pattern.permute.xlu0 0
      %1123 = vperm.xlu0 %1122, %v1093
      %v1124 = vpop.permute.xlu0 %1123
      %1127 = vset.pattern.permute.xlu0 0
      %1128 = vperm.xlu0 %1127, %v1094
      %v1129 = vpop.permute.xlu0 %1128
      %1132 = vset.pattern.permute.xlu0 0
      %1133 = vperm.xlu0 %1132, %v1095
      %v1134 = vpop.permute.xlu0 %1133
      %1137 = vset.pattern.permute.xlu0 0
      %1138 = vperm.xlu0 %1137, %v1096
      %v1139 = vpop.permute.xlu0 %1138
      %1142 = vset.pattern.permute.xlu0 0
      %1143 = vperm.xlu0 %1142, %v1097
      %v1144 = vpop.permute.xlu0 %1143
      %1147 = vset.pattern.permute.xlu0 0
      %1148 = vperm.xlu0 %1147, %v1098
      %v1149 = vpop.permute.xlu0 %1148
      %1152 = vset.pattern.permute.xlu0 0
      %1153 = vperm.xlu0 %1152, %v1099
      %v1154 = vpop.permute.xlu0 %1153
      %1157 = vset.pattern.permute.xlu0 0
      %1158 = vperm.xlu0 %1157, %v1100
      %v1159 = vpop.permute.xlu0 %1158
      %1162 = vset.pattern.permute.xlu0 0
      %1163 = vperm.xlu0 %1162, %v1101
      %v1164 = vpop.permute.xlu0 %1163
      %1167 = vset.pattern.permute.xlu0 0
      %1168 = vperm.xlu0 %1167, %v1102
      %v1169 = vpop.permute.xlu0 %1168
      %1172 = vset.pattern.permute.xlu0 0
      %1173 = vperm.xlu0 %1172, %v1103
      %v1174 = vpop.permute.xlu0 %1173
      %1177 = vset.pattern.permute.xlu0 0
      %1178 = vperm.xlu0 %1177, %v1104
      %v1179 = vpop.permute.xlu0 %1178
      %1182 = vset.pattern.permute.xlu0 0
      %1183 = vperm.xlu0 %1182, %v1105
      %v1184 = vpop.permute.xlu0 %1183
      %v1202 = vunpack.c.l.b16 %v1074
      %v1203 = vunpack.c.l.b16 %v1075
      %v1204 = vunpack.c.l.b16 %v1076
      %v1205 = vunpack.c.l.b16 %v1077
      %v1206 = vunpack.c.l.b16 %v1078
      %v1207 = vunpack.c.l.b16 %v1079
      %v1208 = vunpack.c.l.b16 %v1080
      %v1209 = vunpack.c.l.b16 %v1081
      %v1210 = vunpack.c.l.b16 %v1082
      %v1211 = vunpack.c.l.b16 %v1083
      %v1212 = vunpack.c.l.b16 %v1084
      %v1213 = vunpack.c.l.b16 %v1085
      %v1214 = vunpack.c.l.b16 %v1086
      %v1215 = vunpack.c.l.b16 %v1087
      %v1216 = vunpack.c.l.b16 %v1088
      %v1217 = vunpack.c.l.b16 %v1089
      %v1218 = vpack.c.b16 %v1203, %v1202
      %v1219 = vpack.c.b16 %v1205, %v1204
      %v1220 = vpack.c.b16 %v1207, %v1206
      %v1221 = vpack.c.b16 %v1209, %v1208
      %v1222 = vpack.c.b16 %v1211, %v1210
      %v1223 = vpack.c.b16 %v1213, %v1212
      %v1224 = vpack.c.b16 %v1215, %v1214
      %v1225 = vpack.c.b16 %v1217, %v1216
      %1226 = vrot.lane.b32.xlu0 %v1060, 125
      %v1227 = vpop.permute.xlu0 %1226
      %1228 = vrot.lane.b32.xlu0 %v1062, 125
      %v1229 = vpop.permute.xlu0 %1228
      %1230 = vrot.lane.b32.xlu0 %v1067, 125
      %v1231 = vpop.permute.xlu0 %1230
      %1232 = vrot.lane.b32.xlu0 %v1069, 125
      %v1233 = vpop.permute.xlu0 %1232
      %1234 = vrot.lane.b32.xlu0 %v1071, 125
      %v1235 = vpop.permute.xlu0 %1234
      %1236 = vrot.lane.b32.xlu0 %v1073, 125
      %v1237 = vpop.permute.xlu0 %1236
      %v1245 = vsel %vm845, %v1218, 0
      %v1248 = vsel %vm845, %v1219, 0
      %v1251 = vsel %vm845, %v1220, 0
      %v1254 = vsel %vm845, %v1221, 0
      %v1257 = vsel %vm845, %v1222, 0
      %v1260 = vsel %vm845, %v1223, 0
      %v1263 = vsel %vm845, %v1224, 0
      %v1266 = vsel %vm845, %v1225, 0
      %1268 = vmatprep.subr.bf16.mxu0 0
      %1269 = vmatpush1.bf16.msra.mxu0 %v1227
      %1270 = vmatprep.subr.bf16.mxu0 0
      %1271 = vmatpush1.bf16.msra.mxu0 %v1229
      %1272 = vmatprep.subr.bf16.mxu0 0
      %1273 = vmatpush1.bf16.msra.mxu0 %v1231
      %1274 = vmatprep.subr.bf16.mxu0 0
      %1275 = vmatpush1.bf16.msra.mxu0 %v1233
      %1276 = vmatprep.subr.bf16.mxu0 0
      %1277 = vmatpush1.bf16.msra.mxu0 %v1235
      %1278 = vmatprep.subr.bf16.mxu0 0
      %1279 = vmatpush1.bf16.msra.mxu0 %v1237
      %1280 = vmatprep.subr.bf16.mxu0 0
      %1281 = vmatpush1.bf16.msra.mxu0 0
      %1282 = vmatprep.subr.bf16.mxu0 0
      %1283 = vmatpush1.bf16.msra.mxu0 0
      %1284 = vmatprep.subr.bf16.mxu0 0
      %1285 = vmatpush1.bf16.msra.mxu0 0
      %1286 = vmatprep.subr.bf16.mxu0 0
      %1287 = vmatpush1.bf16.msra.mxu0 0
      %1288 = vmatprep.subr.bf16.mxu0 0
      %1289 = vmatpush1.bf16.msra.mxu0 0
      %1290 = vmatprep.subr.bf16.mxu0 0
      %1291 = vmatpush1.bf16.msra.mxu0 0
      %1292 = vmatprep.subr.bf16.mxu0 0
      %1293 = vmatpush1.bf16.msra.mxu0 0
      %1294 = vmatprep.subr.bf16.mxu0 0
      %1295 = vmatpush1.bf16.msra.mxu0 0
      %1296 = vmatprep.subr.bf16.mxu0 0
      %1297 = vmatpush1.bf16.msra.mxu0 0
      %1298 = vmatprep.subr.bf16.mxu0 0
      %1299 = vmatpush1.bf16.msra.mxu0 0
      %1300 = vmatprep.mubr.bf16.mxu0 0
      %1301 = vmatmul.mubr.bf16.gmra.mrb[0].mxu0 %v1245
      %v1302 = vpop.f32.mrb[0].mxu0
      %v1303 = vadd.f32 %v1109, %v1302
      %v1304 = vpop.f32.mrb[0].mxu0
      %v1305 = vpop.f32.mrb[0].mxu0
      %v1306 = vadd.f32 %v1114, %v1305
      %v1307 = vpop.f32.mrb[0].mxu0
      %1308 = vmatprep.mubr.bf16.mxu0 0
      %1309 = vmatmul.mubr.bf16.gmra.mrb[0].mxu0 %v1248
      %v1310 = vpop.f32.mrb[0].mxu0
      %v1311 = vadd.f32 %v1119, %v1310
      %v1312 = vpop.f32.mrb[0].mxu0
      %v1313 = vpop.f32.mrb[0].mxu0
      %v1314 = vadd.f32 %v1124, %v1313
      %v1315 = vpop.f32.mrb[0].mxu0
      %1316 = vmatprep.mubr.bf16.mxu0 0
      %1317 = vmatmul.mubr.bf16.gmra.mrb[0].mxu0 %v1251
      %v1318 = vpop.f32.mrb[0].mxu0
      %v1319 = vadd.f32 %v1129, %v1318
      %v1320 = vpop.f32.mrb[0].mxu0
      %v1321 = vpop.f32.mrb[0].mxu0
      %v1322 = vadd.f32 %v1134, %v1321
      %v1323 = vpop.f32.mrb[0].mxu0
      %1324 = vmatprep.mubr.bf16.mxu0 0
      %1325 = vmatmul.mubr.bf16.gmra.mrb[0].mxu0 %v1254
      %v1326 = vpop.f32.mrb[0].mxu0
      %v1327 = vadd.f32 %v1139, %v1326
      %v1328 = vpop.f32.mrb[0].mxu0
      %v1329 = vpop.f32.mrb[0].mxu0
      %v1330 = vadd.f32 %v1144, %v1329
      %v1331 = vpop.f32.mrb[0].mxu0
      %1332 = vmatprep.mubr.bf16.mxu0 0
      %1333 = vmatmul.mubr.bf16.gmra.mrb[0].mxu0 %v1257
      %v1334 = vpop.f32.mrb[0].mxu0
      %v1335 = vadd.f32 %v1149, %v1334
      %v1336 = vpop.f32.mrb[0].mxu0
      %v1337 = vpop.f32.mrb[0].mxu0
      %v1338 = vadd.f32 %v1154, %v1337
      %v1339 = vpop.f32.mrb[0].mxu0
      %1340 = vmatprep.mubr.bf16.mxu0 0
      %1341 = vmatmul.mubr.bf16.gmra.mrb[0].mxu0 %v1260
      %v1342 = vpop.f32.mrb[0].mxu0
      %v1343 = vadd.f32 %v1159, %v1342
      %v1344 = vpop.f32.mrb[0].mxu0
      %v1345 = vpop.f32.mrb[0].mxu0
      %v1346 = vadd.f32 %v1164, %v1345
      %v1347 = vpop.f32.mrb[0].mxu0
      %1348 = vmatprep.mubr.bf16.mxu0 0
      %1349 = vmatmul.mubr.bf16.gmra.mrb[0].mxu0 %v1263
      %v1350 = vpop.f32.mrb[0].mxu0
      %v1351 = vadd.f32 %v1169, %v1350
      %v1352 = vpop.f32.mrb[0].mxu0
      %v1353 = vpop.f32.mrb[0].mxu0
      %v1354 = vadd.f32 %v1174, %v1353
      %v1355 = vpop.f32.mrb[0].mxu0
      %1356 = vmatprep.mubr.bf16.mxu0 0
      %1357 = vmatmul.mubr.bf16.gmra.mrb[0].mxu0 %v1266
      %v1358 = vpop.f32.mrb[0].mxu0
      %v1359 = vadd.f32 %v1179, %v1358
      %v1360 = vpop.f32.mrb[0].mxu0
      %v1361 = vpop.f32.mrb[0].mxu0
      %v1362 = vadd.f32 %v1184, %v1361
      %v1363 = vpop.f32.mrb[0].mxu0
      %1364 = vdwg.mxu0
      %v1365 = vmax.f32 %v1303, 0.0
      %v1366 = vmax.f32 %v1306, 0.0
      %v1367 = vmax.f32 %v1311, 0.0
      %v1368 = vmax.f32 %v1314, 0.0
      %v1369 = vmax.f32 %v1319, 0.0
      %v1370 = vmax.f32 %v1322, 0.0
      %v1371 = vmax.f32 %v1327, 0.0
      %v1372 = vmax.f32 %v1330, 0.0
      %v1373 = vpack.c.bf16 %v1366, %v1365
      %v1374 = vpack.c.bf16 %v1368, %v1367
      %v1375 = vpack.c.bf16 %v1370, %v1369
      %v1376 = vpack.c.bf16 %v1372, %v1371
      %v1377 = vmax.f32 %v1351, 0.0
      %v1378 = vmax.f32 %v1354, 0.0
      %v1379 = vmax.f32 %v1359, 0.0
      %v1380 = vmax.f32 %v1362, 0.0
      %v1381 = vpack.c.bf16 %v1378, %v1377
      %v1382 = vpack.c.bf16 %v1380, %v1379
      %v1383 = vunpack.c.l.bf16 %v1048
      %v1384 = vunpack.c.h.bf16 %v1048
      %v1385 = vunpack.c.l.bf16 %v1049
      %v1386 = vunpack.c.h.bf16 %v1049
      %v1387 = vadd.f32 %v1383, %v1335
      %v1388 = vadd.f32 %v1384, %v1338
      %v1389 = vadd.f32 %v1385, %v1343
      %v1390 = vadd.f32 %v1386, %v1346
      %v1391 = vld [vmem:[%s7] sm:$0xf]
      %v1392 = vld [vmem:[%s7 + $0x4] sm:$0xf]
      %v1393 = vld [vmem:[%s7 + $0x8] sm:$0xf]
      %v1394 = vld [vmem:[%s7 + $0xc] sm:$0xf]
      %v1395 = vld [vmem:[%s8] sm:$0xff]
      %v1396 = vld [vmem:[%s8 + $0x8] sm:$0xff]
      %v1397 = vld [vmem:[%s8 + $0x10] sm:$0xff]
      %v1398 = vld [vmem:[%s8 + $0x18] sm:$0xff]
      %1399 = vrot.lane.b32.xlu0 %v1060, 124
      %v1400 = vpop.permute.xlu0 %1399
      %1401 = vrot.lane.b32.xlu0 %v1062, 124
      %v1402 = vpop.permute.xlu0 %1401
      %1404 = vset.pattern.permute.xlu0 0
      %1405 = vperm.xlu0 %1404, %v1395
      %v1406 = vpop.permute.xlu0 %1405
      %1409 = vset.pattern.permute.xlu0 0
      %1410 = vperm.xlu0 %1409, %v1396
      %v1411 = vpop.permute.xlu0 %1410
      %1414 = vset.pattern.permute.xlu0 0
      %1415 = vperm.xlu0 %1414, %v1397
      %v1416 = vpop.permute.xlu0 %1415
      %1419 = vset.pattern.permute.xlu0 0
      %1420 = vperm.xlu0 %1419, %v1398
      %v1421 = vpop.permute.xlu0 %1420
      %v1427 = vunpack.c.l.b16 %v1391
      %v1428 = vunpack.c.l.b16 %v1392
      %v1429 = vunpack.c.l.b16 %v1393
      %v1430 = vunpack.c.l.b16 %v1394
      %v1431 = vpack.c.b16 %v1428, %v1427
      %v1432 = vpack.c.b16 %v1430, %v1429
      %1433 = vrot.lane.b32.xlu0 %v1071, 126
      %v1434 = vpop.permute.xlu0 %1433
      %1435 = vrot.lane.b32.xlu0 %v1073, 126
      %v1436 = vpop.permute.xlu0 %1435
      %1437 = vrot.lane.b32.xlu0 %v1400, 126
      %v1438 = vpop.permute.xlu0 %1437
      %1439 = vrot.lane.b32.xlu0 %v1402, 126
      %v1440 = vpop.permute.xlu0 %1439
      %v1448 = vsel %vm845, %v1431, 0
      %v1451 = vsel %vm845, %v1432, 0
      %1453 = vmatprep.subr.bf16.mxu0 0
      %1454 = vmatpush1.bf16.msra.mxu0 %v1071
      %1455 = vmatprep.subr.bf16.mxu0 0
      %1456 = vmatpush1.bf16.msra.mxu0 %v1073
      %1457 = vmatprep.subr.bf16.mxu0 0
      %1458 = vmatpush1.bf16.msra.mxu0 %v1434
      %1459 = vmatprep.subr.bf16.mxu0 0
      %1460 = vmatpush1.bf16.msra.mxu0 %v1436
      %1461 = vmatprep.subr.bf16.mxu0 0
      %1462 = vmatpush1.bf16.msra.mxu0 %v1438
      %1463 = vmatprep.subr.bf16.mxu0 0
      %1464 = vmatpush1.bf16.msra.mxu0 %v1440
      %1465 = vmatprep.subr.bf16.mxu0 0
      %1466 = vmatpush1.bf16.msra.mxu0 0
      %1467 = vmatprep.subr.bf16.mxu0 0
      %1468 = vmatpush1.bf16.msra.mxu0 0
      %1469 = vmatprep.subr.bf16.mxu0 0
      %1470 = vmatpush1.bf16.msra.mxu0 0
      %1471 = vmatprep.subr.bf16.mxu0 0
      %1472 = vmatpush1.bf16.msra.mxu0 0
      %1473 = vmatprep.subr.bf16.mxu0 0
      %1474 = vmatpush1.bf16.msra.mxu0 0
      %1475 = vmatprep.subr.bf16.mxu0 0
      %1476 = vmatpush1.bf16.msra.mxu0 0
      %1477 = vmatprep.subr.bf16.mxu0 0
      %1478 = vmatpush1.bf16.msra.mxu0 0
      %1479 = vmatprep.subr.bf16.mxu0 0
      %1480 = vmatpush1.bf16.msra.mxu0 0
      %1481 = vmatprep.subr.bf16.mxu0 0
      %1482 = vmatpush1.bf16.msra.mxu0 0
      %1483 = vmatprep.subr.bf16.mxu0 0
      %1484 = vmatpush1.bf16.msra.mxu0 0
      %1485 = vmatprep.mubr.bf16.mxu0 0
      %1486 = vmatmul.mubr.bf16.gmra.mrb[0].mxu0 %v1448
      %v1487 = vpop.f32.mrb[0].mxu0
      %v1488 = vadd.f32 %v1406, %v1487
      %v1489 = vpop.f32.mrb[0].mxu0
      %v1490 = vpop.f32.mrb[0].mxu0
      %v1491 = vadd.f32 %v1411, %v1490
      %v1492 = vpop.f32.mrb[0].mxu0
      %1493 = vmatprep.mubr.bf16.mxu0 0
      %1494 = vmatmul.mubr.bf16.gmra.mrb[0].mxu0 %v1451
      %v1495 = vpop.f32.mrb[0].mxu0
      %v1496 = vadd.f32 %v1416, %v1495
      %v1497 = vpop.f32.mrb[0].mxu0
      %v1498 = vpop.f32.mrb[0].mxu0
      %v1499 = vadd.f32 %v1421, %v1498
      %v1500 = vpop.f32.mrb[0].mxu0
      %1501 = vdwg.mxu0
      %v1502 = vadd.f32 %v1387, %v1488
      %v1503 = vadd.f32 %v1388, %v1491
      %v1504 = vadd.f32 %v1389, %v1496
      %v1505 = vadd.f32 %v1390, %v1499
      %s1506 = scalar_lea.vmem %s7, 16
      %v1507 = vld [vmem:[%s1506] sm:$0xf]
      %v1508 = vld [vmem:[%s1506 + $0x4] sm:$0xf]
      %v1509 = vld [vmem:[%s1506 + $0x8] sm:$0xf]
      %v1510 = vld [vmem:[%s1506 + $0xc] sm:$0xf]
      %s1511 = scalar_lea.vmem %s8, 32
      %v1512 = vld [vmem:[%s1511] sm:$0xff]
      %v1513 = vld [vmem:[%s1511 + $0x8] sm:$0xff]
      %v1514 = vld [vmem:[%s1511 + $0x10] sm:$0xff]
      %v1515 = vld [vmem:[%s1511 + $0x18] sm:$0xff]
      %1518 = vrot.lane.b32.xlu0 %v1060, 120
      %v1519 = vpop.permute.xlu0 %1518
      %1520 = vrot.lane.b32.xlu0 %v1062, 120
      %v1521 = vpop.permute.xlu0 %1520
      %1525 = vset.pattern.permute.xlu0 0
      %1526 = vperm.xlu0 %1525, %v1512
      %v1527 = vpop.permute.xlu0 %1526
      %1530 = vset.pattern.permute.xlu0 0
      %1531 = vperm.xlu0 %1530, %v1513
      %v1532 = vpop.permute.xlu0 %1531
      %1535 = vset.pattern.permute.xlu0 0
      %1536 = vperm.xlu0 %1535, %v1514
      %v1537 = vpop.permute.xlu0 %1536
      %1540 = vset.pattern.permute.xlu0 0
      %1541 = vperm.xlu0 %1540, %v1515
      %v1542 = vpop.permute.xlu0 %1541
      %v1548 = vunpack.c.l.b16 %v1507
      %v1549 = vunpack.c.l.b16 %v1508
      %v1550 = vunpack.c.l.b16 %v1509
      %v1551 = vunpack.c.l.b16 %v1510
      %v1552 = vpack.c.b16 %v1549, %v1548
      %v1553 = vpack.c.b16 %v1551, %v1550
      %v1555 = vsel %vm845, %v1552, 0
      %v1558 = vsel %vm845, %v1553, 0
      %1560 = vmatprep.subr.bf16.mxu0 0
      %1561 = vmatpush1.bf16.msra.mxu0 %v1060
      %1562 = vmatprep.subr.bf16.mxu0 0
      %1563 = vmatpush1.bf16.msra.mxu0 %v1062
      %1564 = vmatprep.subr.bf16.mxu0 0
      %1565 = vmatpush1.bf16.msra.mxu0 %v1400
      %1566 = vmatprep.subr.bf16.mxu0 0
      %1567 = vmatpush1.bf16.msra.mxu0 %v1402
      %1568 = vmatprep.subr.bf16.mxu0 0
      %1569 = vmatpush1.bf16.msra.mxu0 %v1519
      %1570 = vmatprep.subr.bf16.mxu0 0
      %1571 = vmatpush1.bf16.msra.mxu0 %v1521
      %1572 = vmatprep.subr.bf16.mxu0 0
      %1573 = vmatpush1.bf16.msra.mxu0 0
      %1574 = vmatprep.subr.bf16.mxu0 0
      %1575 = vmatpush1.bf16.msra.mxu0 0
      %1576 = vmatprep.subr.bf16.mxu0 0
      %1577 = vmatpush1.bf16.msra.mxu0 0
      %1578 = vmatprep.subr.bf16.mxu0 0
      %1579 = vmatpush1.bf16.msra.mxu0 0
      %1580 = vmatprep.subr.bf16.mxu0 0
      %1581 = vmatpush1.bf16.msra.mxu0 0
      %1582 = vmatprep.subr.bf16.mxu0 0
      %1583 = vmatpush1.bf16.msra.mxu0 0
      %1584 = vmatprep.subr.bf16.mxu0 0
      %1585 = vmatpush1.bf16.msra.mxu0 0
      %1586 = vmatprep.subr.bf16.mxu0 0
      %1587 = vmatpush1.bf16.msra.mxu0 0
      %1588 = vmatprep.subr.bf16.mxu0 0
      %1589 = vmatpush1.bf16.msra.mxu0 0
      %1590 = vmatprep.subr.bf16.mxu0 0
      %1591 = vmatpush1.bf16.msra.mxu0 0
      %1592 = vmatprep.mubr.bf16.mxu0 0
      %1593 = vmatmul.mubr.bf16.gmra.mrb[0].mxu0 %v1555
      %v1594 = vpop.f32.mrb[0].mxu0
      %v1595 = vadd.f32 %v1527, %v1594
      %v1596 = vpop.f32.mrb[0].mxu0
      %v1597 = vpop.f32.mrb[0].mxu0
      %v1598 = vadd.f32 %v1532, %v1597
      %v1599 = vpop.f32.mrb[0].mxu0
      %1600 = vmatprep.mubr.bf16.mxu0 0
      %1601 = vmatmul.mubr.bf16.gmra.mrb[0].mxu0 %v1558
      %v1602 = vpop.f32.mrb[0].mxu0
      %v1603 = vadd.f32 %v1537, %v1602
      %v1604 = vpop.f32.mrb[0].mxu0
      %v1605 = vpop.f32.mrb[0].mxu0
      %v1606 = vadd.f32 %v1542, %v1605
      %v1607 = vpop.f32.mrb[0].mxu0
      %1608 = vdwg.mxu0
      %v1609 = vadd.f32 %v1502, %v1595
      %v1610 = vadd.f32 %v1503, %v1598
      %v1611 = vadd.f32 %v1504, %v1603
      %v1612 = vadd.f32 %v1505, %v1606
      %v1613 = vmax.f32 %v1609, 0.0
      %v1614 = vmax.f32 %v1610, 0.0
      %v1615 = vmax.f32 %v1611, 0.0
      %v1616 = vmax.f32 %v1612, 0.0
      %v1617 = vpack.c.bf16 %v1614, %v1613
      %v1618 = vpack.c.bf16 %v1616, %v1615
      %1621 = vrot.lane.b32.xlu0 %v1617, 1
      %v1622 = vpop.permute.xlu0 %1621
      %1623 = vrot.lane.b32.xlu0 %v1618, 1
      %v1624 = vpop.permute.xlu0 %1623
      %vm1625 = vcmask 7168
      %v1627 = vsel %vm1625, 0, %v1622
      %v1629 = vsel %vm1625, 0, %v1624
      %vm1630 = vcmask 138240
      %v1631 = vsel %vm1630, %v1627, 0
      %v1633 = vsel %vm1630, %v1629, 0
      %1637 = vrot.lane.b32.xlu0 %v1631, 127
      %v1638 = vpop.permute.xlu0 %1637
      %1639 = vrot.lane.b32.xlu0 %v1633, 127
      %v1640 = vpop.permute.xlu0 %1639
      %1643 = vrot.lane.b32.xlu0 %v1631, 126
      %v1644 = vpop.permute.xlu0 %1643
      %1645 = vrot.lane.b32.xlu0 %v1633, 126
      %v1646 = vpop.permute.xlu0 %1645
      %v1649 = vld [vmem:[%s9] sm:$0xf]
      %v1650 = vld [vmem:[%s9 + $0x4] sm:$0xf]
      %v1651 = vld [vmem:[%s9 + $0x8] sm:$0xf]
      %v1652 = vld [vmem:[%s9 + $0xc] sm:$0xf]
      %v1653 = vld [vmem:[%s9 + $0x10] sm:$0xf]
      %v1654 = vld [vmem:[%s9 + $0x14] sm:$0xf]
      %v1655 = vld [vmem:[%s9 + $0x18] sm:$0xf]
      %v1656 = vld [vmem:[%s9 + $0x1c] sm:$0xf]
      %v1657 = vld [vmem:[%s10] sm:$0xff]
      %v1658 = vld [vmem:[%s10 + $0x8] sm:$0xff]
      %v1659 = vld [vmem:[%s10 + $0x10] sm:$0xff]
      %v1660 = vld [vmem:[%s10 + $0x18] sm:$0xff]
      %v1661 = vld [vmem:[%s10 + $0x20] sm:$0xff]
      %v1662 = vld [vmem:[%s10 + $0x28] sm:$0xff]
      %v1663 = vld [vmem:[%s10 + $0x30] sm:$0xff]
      %v1664 = vld [vmem:[%s10 + $0x38] sm:$0xff]
      %1666 = vset.pattern.permute.xlu0 0
      %1667 = vperm.xlu0 %1666, %v1657
      %v1668 = vpop.permute.xlu0 %1667
      %1671 = vset.pattern.permute.xlu0 0
      %1672 = vperm.xlu0 %1671, %v1658
      %v1673 = vpop.permute.xlu0 %1672
      %1676 = vset.pattern.permute.xlu0 0
      %1677 = vperm.xlu0 %1676, %v1659
      %v1678 = vpop.permute.xlu0 %1677
      %1681 = vset.pattern.permute.xlu0 0
      %1682 = vperm.xlu0 %1681, %v1660
      %v1683 = vpop.permute.xlu0 %1682
      %1686 = vset.pattern.permute.xlu0 0
      %1687 = vperm.xlu0 %1686, %v1661
      %v1688 = vpop.permute.xlu0 %1687
      %1691 = vset.pattern.permute.xlu0 0
      %1692 = vperm.xlu0 %1691, %v1662
      %v1693 = vpop.permute.xlu0 %1692
      %1696 = vset.pattern.permute.xlu0 0
      %1697 = vperm.xlu0 %1696, %v1663
      %v1698 = vpop.permute.xlu0 %1697
      %1701 = vset.pattern.permute.xlu0 0
      %1702 = vperm.xlu0 %1701, %v1664
      %v1703 = vpop.permute.xlu0 %1702
      %v1713 = vunpack.c.l.b16 %v1649
      %v1714 = vunpack.c.l.b16 %v1650
      %v1715 = vunpack.c.l.b16 %v1651
      %v1716 = vunpack.c.l.b16 %v1652
      %v1717 = vunpack.c.l.b16 %v1653
      %v1718 = vunpack.c.l.b16 %v1654
      %v1719 = vunpack.c.l.b16 %v1655
      %v1720 = vunpack.c.l.b16 %v1656
      %v1721 = vpack.c.b16 %v1714, %v1713
      %v1722 = vpack.c.b16 %v1716, %v1715
      %v1723 = vpack.c.b16 %v1718, %v1717
      %v1724 = vpack.c.b16 %v1720, %v1719
      %v1726 = vsel %vm845, %v1721, 0
      %v1729 = vsel %vm845, %v1722, 0
      %v1732 = vsel %vm845, %v1723, 0
      %v1735 = vsel %vm845, %v1724, 0
      %1737 = vmatprep.subr.bf16.mxu0 0
      %1738 = vmatpush1.bf16.msra.mxu0 %v1631
      %1739 = vmatprep.subr.bf16.mxu0 0
      %1740 = vmatpush1.bf16.msra.mxu0 %v1633
      %1741 = vmatprep.subr.bf16.mxu0 0
      %1742 = vmatpush1.bf16.msra.mxu0 %v1638
      %1743 = vmatprep.subr.bf16.mxu0 0
      %1744 = vmatpush1.bf16.msra.mxu0 %v1640
      %1745 = vmatprep.subr.bf16.mxu0 0
      %1746 = vmatpush1.bf16.msra.mxu0 %v1644
      %1747 = vmatprep.subr.bf16.mxu0 0
      %1748 = vmatpush1.bf16.msra.mxu0 %v1646
      %1749 = vmatprep.subr.bf16.mxu0 0
      %1750 = vmatpush1.bf16.msra.mxu0 0
      %1751 = vmatprep.subr.bf16.mxu0 0
      %1752 = vmatpush1.bf16.msra.mxu0 0
      %1753 = vmatprep.subr.bf16.mxu0 0
      %1754 = vmatpush1.bf16.msra.mxu0 0
      %1755 = vmatprep.subr.bf16.mxu0 0
      %1756 = vmatpush1.bf16.msra.mxu0 0
      %1757 = vmatprep.subr.bf16.mxu0 0
      %1758 = vmatpush1.bf16.msra.mxu0 0
      %1759 = vmatprep.subr.bf16.mxu0 0
      %1760 = vmatpush1.bf16.msra.mxu0 0
      %1761 = vmatprep.subr.bf16.mxu0 0
      %1762 = vmatpush1.bf16.msra.mxu0 0
      %1763 = vmatprep.subr.bf16.mxu0 0
      %1764 = vmatpush1.bf16.msra.mxu0 0
      %1765 = vmatprep.subr.bf16.mxu0 0
      %1766 = vmatpush1.bf16.msra.mxu0 0
      %1767 = vmatprep.subr.bf16.mxu0 0
      %1768 = vmatpush1.bf16.msra.mxu0 0
      %1769 = vmatprep.mubr.bf16.mxu0 0
      %1770 = vmatmul.mubr.bf16.gmra.mrb[0].mxu0 %v1726
      %v1771 = vpop.f32.mrb[0].mxu0
      %v1772 = vadd.f32 %v1668, %v1771
      %v1773 = vpop.f32.mrb[0].mxu0
      %v1774 = vpop.f32.mrb[0].mxu0
      %v1775 = vadd.f32 %v1673, %v1774
      %v1776 = vpop.f32.mrb[0].mxu0
      %1777 = vmatprep.mubr.bf16.mxu0 0
      %1778 = vmatmul.mubr.bf16.gmra.mrb[0].mxu0 %v1729
      %v1779 = vpop.f32.mrb[0].mxu0
      %v1780 = vadd.f32 %v1678, %v1779
      %v1781 = vpop.f32.mrb[0].mxu0
      %v1782 = vpop.f32.mrb[0].mxu0
      %v1783 = vadd.f32 %v1683, %v1782
      %v1784 = vpop.f32.mrb[0].mxu0
      %1785 = vmatprep.mubr.bf16.mxu0 0
      %1786 = vmatmul.mubr.bf16.gmra.mrb[0].mxu0 %v1732
      %v1787 = vpop.f32.mrb[0].mxu0
      %v1788 = vadd.f32 %v1688, %v1787
      %v1789 = vpop.f32.mrb[0].mxu0
      %v1790 = vpop.f32.mrb[0].mxu0
      %v1791 = vadd.f32 %v1693, %v1790
      %v1792 = vpop.f32.mrb[0].mxu0
      %1793 = vmatprep.mubr.bf16.mxu0 0
      %1794 = vmatmul.mubr.bf16.gmra.mrb[0].mxu0 %v1735
      %v1795 = vpop.f32.mrb[0].mxu0
      %v1796 = vadd.f32 %v1698, %v1795
      %v1797 = vpop.f32.mrb[0].mxu0
      %v1798 = vpop.f32.mrb[0].mxu0
      %v1799 = vadd.f32 %v1703, %v1798
      %v1800 = vpop.f32.mrb[0].mxu0
      %1801 = vdwg.mxu0
      %v1802 = vmax.f32 %v1772, 0.0
      %v1803 = vmax.f32 %v1775, 0.0
      %v1804 = vmax.f32 %v1780, 0.0
      %v1805 = vmax.f32 %v1783, 0.0
      %v1806 = vmax.f32 %v1788, 0.0
      %v1807 = vmax.f32 %v1791, 0.0
      %v1808 = vmax.f32 %v1796, 0.0
      %v1809 = vmax.f32 %v1799, 0.0
      %v1810 = vpack.c.bf16 %v1803, %v1802
      %v1811 = vpack.c.bf16 %v1805, %v1804
      %v1812 = vpack.c.bf16 %v1807, %v1806
      %v1813 = vpack.c.bf16 %v1809, %v1808
      %v1814 = vld [vmem:[%s11] sm:$0x1]
      %v1815 = vld [vmem:[%s12] sm:$0x3]
      %1817 = vset.pattern.permute.xlu0 0
      %1818 = vperm.xlu0 %1817, %v1815
      %v1819 = vpop.permute.xlu0 %1818
      %vm1821 = vcmask 523264
      %v1823 = vsel %vm1821, %v1814, 0
      %1825 = vmatprep.subr.bf16.mxu0 0
      %1826 = vmatpush1.bf16.msra.mxu0 %v1810
      %1827 = vmatprep.subr.bf16.mxu0 0
      %1828 = vmatpush1.bf16.msra.mxu0 %v1811
      %1829 = vmatprep.subr.bf16.mxu0 0
      %1830 = vmatpush1.bf16.msra.mxu0 %v1812
      %1831 = vmatprep.subr.bf16.mxu0 0
      %1832 = vmatpush1.bf16.msra.mxu0 %v1813
      %1833 = vmatprep.subr.bf16.mxu0 0
      %1834 = vmatpush1.bf16.msra.mxu0 0
      %1835 = vmatprep.subr.bf16.mxu0 0
      %1836 = vmatpush1.bf16.msra.mxu0 0
      %1837 = vmatprep.subr.bf16.mxu0 0
      %1838 = vmatpush1.bf16.msra.mxu0 0
      %1839 = vmatprep.subr.bf16.mxu0 0
      %1840 = vmatpush1.bf16.msra.mxu0 0
      %1841 = vmatprep.subr.bf16.mxu0 0
      %1842 = vmatpush1.bf16.msra.mxu0 0
      %1843 = vmatprep.subr.bf16.mxu0 0
      %1844 = vmatpush1.bf16.msra.mxu0 0
      %1845 = vmatprep.subr.bf16.mxu0 0
      %1846 = vmatpush1.bf16.msra.mxu0 0
      %1847 = vmatprep.subr.bf16.mxu0 0
      %1848 = vmatpush1.bf16.msra.mxu0 0
      %1849 = vmatprep.subr.bf16.mxu0 0
      %1850 = vmatpush1.bf16.msra.mxu0 0
      %1851 = vmatprep.subr.bf16.mxu0 0
      %1852 = vmatpush1.bf16.msra.mxu0 0
      %1853 = vmatprep.subr.bf16.mxu0 0
      %1854 = vmatpush1.bf16.msra.mxu0 0
      %1855 = vmatprep.subr.bf16.mxu0 0
      %1856 = vmatpush1.bf16.msra.mxu0 0
      %1857 = vmatprep.mubr.bf16.mxu0 0
      %1858 = vmatmul.mubr.bf16.gmra.mrb[0].mxu0 %v1823
      %v1859 = vpop.f32.mrb[0].mxu0
      %v1860 = vadd.f32 %v1819, %v1859
      %v1861 = vpop.f32.mrb[0].mxu0
      %v1862 = vpop.f32.mrb[0].mxu0
      %v1863 = vpop.f32.mrb[0].mxu0
      %1864 = vdwg.mxu0
      %v1865 = vxor.u32 %v1860, 2147483648
      %v1866 = vmul.f32 %v1865, 1.442695
      %v1867 = vpow.pop %v1866
      %v1868 = vadd.f32 %v1867, 1.0
      %v1869 = vrcp.pop %v1868
      %v1870 = vmul.f32 1.0, %v1869
      %v1871 = vld [vmem:[%s13] sm:$0x1]
      %v1872 = vld [vmem:[%s14] sm:$0x3]
      %1874 = vset.pattern.permute.xlu0 0
      %1875 = vperm.xlu0 %1874, %v1872
      %v1876 = vpop.permute.xlu0 %1875
      %v1879 = vsel %vm1821, %v1871, 0
      %1881 = vmatprep.subr.bf16.mxu0 0
      %1882 = vmatpush1.bf16.msra.mxu0 %v1373
      %1883 = vmatprep.subr.bf16.mxu0 0
      %1884 = vmatpush1.bf16.msra.mxu0 %v1374
      %1885 = vmatprep.subr.bf16.mxu0 0
      %1886 = vmatpush1.bf16.msra.mxu0 %v1375
      %1887 = vmatprep.subr.bf16.mxu0 0
      %1888 = vmatpush1.bf16.msra.mxu0 %v1376
      %1889 = vmatprep.subr.bf16.mxu0 0
      %1890 = vmatpush1.bf16.msra.mxu0 0
      %1891 = vmatprep.subr.bf16.mxu0 0
      %1892 = vmatpush1.bf16.msra.mxu0 0
      %1893 = vmatprep.subr.bf16.mxu0 0
      %1894 = vmatpush1.bf16.msra.mxu0 0
      %1895 = vmatprep.subr.bf16.mxu0 0
      %1896 = vmatpush1.bf16.msra.mxu0 0
      %1897 = vmatprep.subr.bf16.mxu0 0
      %1898 = vmatpush1.bf16.msra.mxu0 0
      %1899 = vmatprep.subr.bf16.mxu0 0
      %1900 = vmatpush1.bf16.msra.mxu0 0
      %1901 = vmatprep.subr.bf16.mxu0 0
      %1902 = vmatpush1.bf16.msra.mxu0 0
      %1903 = vmatprep.subr.bf16.mxu0 0
      %1904 = vmatpush1.bf16.msra.mxu0 0
      %1905 = vmatprep.subr.bf16.mxu0 0
      %1906 = vmatpush1.bf16.msra.mxu0 0
      %1907 = vmatprep.subr.bf16.mxu0 0
      %1908 = vmatpush1.bf16.msra.mxu0 0
      %1909 = vmatprep.subr.bf16.mxu0 0
      %1910 = vmatpush1.bf16.msra.mxu0 0
      %1911 = vmatprep.subr.bf16.mxu0 0
      %1912 = vmatpush1.bf16.msra.mxu0 0
      %1913 = vmatprep.mubr.bf16.mxu0 0
      %1914 = vmatmul.mubr.bf16.gmra.mrb[0].mxu0 %v1879
      %v1915 = vpop.f32.mrb[0].mxu0
      %v1916 = vadd.f32 %v1876, %v1915
      %v1917 = vpop.f32.mrb[0].mxu0
      %v1918 = vpop.f32.mrb[0].mxu0
      %v1919 = vpop.f32.mrb[0].mxu0
      %1920 = vdwg.mxu0
      %v1921 = vxor.u32 %v1916, 2147483648
      %v1922 = vmul.f32 %v1921, 1.442695
      %v1923 = vpow.pop %v1922
      %v1924 = vadd.f32 %v1923, 1.0
      %v1925 = vrcp.pop %v1924
      %v1926 = vmul.f32 1.0, %v1925
      %v1928 = vrot.slane %v1926, 6
      %vm1930 = vcmask 1041408
      %v1931 = vsel %vm1930, %v1870, %v1928
      %vm1932 = vcmask 125952
      %1933 = vst.msk [vmem:[%s662] sm:$0xf] %vm1932, %v1931
      %v1934 = vld [vmem:[%s15] sm:$0xf]
      %v1935 = vld [vmem:[%s15 + $0x4] sm:$0xf]
      %v1936 = vld [vmem:[%s15 + $0x8] sm:$0xf]
      %v1937 = vld [vmem:[%s15 + $0xc] sm:$0xf]
      %v1942 = vunpack.c.l.b16 %v1934
      %v1943 = vunpack.c.l.b16 %v1935
      %v1944 = vunpack.c.l.b16 %v1936
      %v1945 = vunpack.c.l.b16 %v1937
      %v1946 = vpack.c.b16 %v1943, %v1942
      %v1947 = vpack.c.b16 %v1945, %v1944
      %vm1948 = vcmask 261120
      %v1950 = vsel %vm1948, %v1946, 0
      %v1953 = vsel %vm1948, %v1947, 0
      %1955 = vmatprep.subr.bf16.mxu0 0
      %1956 = vmatpush1.bf16.msra.mxu0 %v1381
      %1957 = vmatprep.subr.bf16.mxu0 0
      %1958 = vmatpush1.bf16.msra.mxu0 %v1382
      %1959 = vmatprep.subr.bf16.mxu0 0
      %1960 = vmatpush1.bf16.msra.mxu0 0
      %1961 = vmatprep.subr.bf16.mxu0 0
      %1962 = vmatpush1.bf16.msra.mxu0 0
      %1963 = vmatprep.subr.bf16.mxu0 0
      %1964 = vmatpush1.bf16.msra.mxu0 0
      %1965 = vmatprep.subr.bf16.mxu0 0
      %1966 = vmatpush1.bf16.msra.mxu0 0
      %1967 = vmatprep.subr.bf16.mxu0 0
      %1968 = vmatpush1.bf16.msra.mxu0 0
      %1969 = vmatprep.subr.bf16.mxu0 0
      %1970 = vmatpush1.bf16.msra.mxu0 0
      %1971 = vmatprep.subr.bf16.mxu0 0
      %1972 = vmatpush1.bf16.msra.mxu0 0
      %1973 = vmatprep.subr.bf16.mxu0 0
      %1974 = vmatpush1.bf16.msra.mxu0 0
      %1975 = vmatprep.subr.bf16.mxu0 0
      %1976 = vmatpush1.bf16.msra.mxu0 0
      %1977 = vmatprep.subr.bf16.mxu0 0
      %1978 = vmatpush1.bf16.msra.mxu0 0
      %1979 = vmatprep.subr.bf16.mxu0 0
      %1980 = vmatpush1.bf16.msra.mxu0 0
      %1981 = vmatprep.subr.bf16.mxu0 0
      %1982 = vmatpush1.bf16.msra.mxu0 0
      %1983 = vmatprep.subr.bf16.mxu0 0
      %1984 = vmatpush1.bf16.msra.mxu0 0
      %1985 = vmatprep.subr.bf16.mxu0 0
      %1986 = vmatpush1.bf16.msra.mxu0 0
      %1987 = vmatprep.mubr.bf16.mxu0 0
      %1988 = vmatmul.mubr.bf16.gmra.mrb[0].mxu0 %v1950
      %v1989 = vpop.f32.mrb[0].mxu0
      %v1990 = vadd.f32 0.0, %v1989
      %v1991 = vpop.f32.mrb[0].mxu0
      %v1992 = vpop.f32.mrb[0].mxu0
      %v1993 = vadd.f32 0.0, %v1992
      %v1994 = vpop.f32.mrb[0].mxu0
      %1995 = vmatprep.mubr.bf16.mxu0 0
      %1996 = vmatmul.mubr.bf16.gmra.mrb[0].mxu0 %v1953
      %v1997 = vpop.f32.mrb[0].mxu0
      %v1998 = vadd.f32 0.0, %v1997
      %v1999 = vpop.f32.mrb[0].mxu0
      %v2000 = vpop.f32.mrb[0].mxu0
      %v2001 = vadd.f32 0.0, %v2000
      %v2002 = vpop.f32.mrb[0].mxu0
      %2003 = vdwg.mxu0
      %v2004 = vpack.c.bf16 %v1993, %v1990
      %v2005 = vpack.c.bf16 %v2001, %v1998
      %v2006 = vld [vmem:[%s19] sm:$0xff]
      %v2007 = vld [vmem:[%s19 + $0x8] sm:$0xff]
      %v2008 = vld [vmem:[%s16] sm:$0xff]
      %v2009 = vld [vmem:[%s16 + $0x8] sm:$0xff]
      %v2010 = vld [vmem:[%s16 + $0x10] sm:$0xff]
      %v2011 = vld [vmem:[%s16 + $0x18] sm:$0xff]
      %2013 = vset.pattern.permute.xlu0 0
      %2014 = vperm.xlu0 %2013, %v2008
      %v2015 = vpop.permute.xlu0 %2014
      %2018 = vset.pattern.permute.xlu0 0
      %2019 = vperm.xlu0 %2018, %v2009
      %v2020 = vpop.permute.xlu0 %2019
      %2023 = vset.pattern.permute.xlu0 0
      %2024 = vperm.xlu0 %2023, %v2010
      %v2025 = vpop.permute.xlu0 %2024
      %2028 = vset.pattern.permute.xlu0 0
      %2029 = vperm.xlu0 %2028, %v2011
      %v2030 = vpop.permute.xlu0 %2029
      %v2034 = vunpack.c.l.b16 %v2006
      %v2035 = vunpack.c.h.b16 %v2006
      %v2036 = vunpack.c.l.b16 %v2007
      %v2037 = vunpack.c.h.b16 %v2007
      %v2038 = vpack.c.b16 %v2036, %v2034
      %v2039 = vpack.c.b16 %v2037, %v2035
      %v2043 = vsel %vm710, %v2004, 0
      %v2046 = vsel %vm710, %v2005, 0
      %2048 = vmatprep.subr.bf16.mxu0 %v2039
      %2049 = vmatpush1.bf16.msra.mxu0 %v2038
      %2050 = vmatprep.subr.bf16.mxu0 0
      %2051 = vmatpush1.bf16.msra.mxu0 0
      %2052 = vmatprep.subr.bf16.mxu0 0
      %2053 = vmatpush1.bf16.msra.mxu0 0
      %2054 = vmatprep.subr.bf16.mxu0 0
      %2055 = vmatpush1.bf16.msra.mxu0 0
      %2056 = vmatprep.subr.bf16.mxu0 0
      %2057 = vmatpush1.bf16.msra.mxu0 0
      %2058 = vmatprep.subr.bf16.mxu0 0
      %2059 = vmatpush1.bf16.msra.mxu0 0
      %2060 = vmatprep.subr.bf16.mxu0 0
      %2061 = vmatpush1.bf16.msra.mxu0 0
      %2062 = vmatprep.subr.bf16.mxu0 0
      %2063 = vmatpush1.bf16.msra.mxu0 0
      %2064 = vmatprep.subr.bf16.mxu0 0
      %2065 = vmatpush1.bf16.msra.mxu0 0
      %2066 = vmatprep.subr.bf16.mxu0 0
      %2067 = vmatpush1.bf16.msra.mxu0 0
      %2068 = vmatprep.subr.bf16.mxu0 0
      %2069 = vmatpush1.bf16.msra.mxu0 0
      %2070 = vmatprep.subr.bf16.mxu0 0
      %2071 = vmatpush1.bf16.msra.mxu0 0
      %2072 = vmatprep.subr.bf16.mxu0 0
      %2073 = vmatpush1.bf16.msra.mxu0 0
      %2074 = vmatprep.subr.bf16.mxu0 0
      %2075 = vmatpush1.bf16.msra.mxu0 0
      %2076 = vmatprep.subr.bf16.mxu0 0
      %2077 = vmatpush1.bf16.msra.mxu0 0
      %2078 = vmatprep.subr.bf16.mxu0 0
      %2079 = vmatpush1.bf16.msra.mxu0 0
      %2080 = vmatprep.mubr.bf16.mxu0 0
      %2081 = vmatmul.mubr.bf16.gmra.mrb[0].mxu0 %v2043
      %v2082 = vpop.f32.mrb[0].mxu0
      %v2083 = vadd.f32 %v2015, %v2082
      %v2084 = vpop.f32.mrb[0].mxu0
      %v2085 = vadd.f32 %v2015, %v2084
      %v2086 = vpop.f32.mrb[0].mxu0
      %v2087 = vadd.f32 %v2020, %v2086
      %v2088 = vpop.f32.mrb[0].mxu0
      %v2089 = vadd.f32 %v2020, %v2088
      %2090 = vmatprep.mubr.bf16.mxu0 0
      %2091 = vmatmul.mubr.bf16.gmra.mrb[0].mxu0 %v2046
      %v2092 = vpop.f32.mrb[0].mxu0
      %v2093 = vadd.f32 %v2025, %v2092
      %v2094 = vpop.f32.mrb[0].mxu0
      %v2095 = vadd.f32 %v2025, %v2094
      %v2096 = vpop.f32.mrb[0].mxu0
      %v2097 = vadd.f32 %v2030, %v2096
      %v2098 = vpop.f32.mrb[0].mxu0
      %v2099 = vadd.f32 %v2030, %v2098
      %2100 = vdwg.mxu0
      %v2101 = vmax.f32 %v2083, 0.0
      %v2102 = vmax.f32 %v2085, 0.0
      %v2103 = vmax.f32 %v2087, 0.0
      %v2104 = vmax.f32 %v2089, 0.0
      %v2105 = vmax.f32 %v2093, 0.0
      %v2106 = vmax.f32 %v2095, 0.0
      %v2107 = vmax.f32 %v2097, 0.0
      %v2108 = vmax.f32 %v2099, 0.0
      %v2109 = vld [vmem:[%s17] sm:$0x1]
      %v2110 = vpack.c.bf16 %v2103, %v2101
      %v2111 = vpack.c.bf16 %v2104, %v2102
      %v2112 = vpack.c.bf16 %v2107, %v2105
      %v2113 = vpack.c.bf16 %v2108, %v2106
      %v2114 = vld [vmem:[%s18] sm:$0x3]
      %2116 = vset.pattern.permute.xlu0 0
      %2117 = vperm.xlu0 %2116, %v2114
      %v2118 = vpop.permute.xlu0 %2117
      %v2121 = vsel %vm1948, %v2109, 0
      %2123 = vmatprep.subr.bf16.mxu0 %v2111
      %2124 = vmatpush1.bf16.msra.mxu0 %v2110
      %2125 = vmatprep.subr.bf16.mxu0 %v2113
      %2126 = vmatpush1.bf16.msra.mxu0 %v2112
      %2127 = vmatprep.subr.bf16.mxu0 0
      %2128 = vmatpush1.bf16.msra.mxu0 0
      %2129 = vmatprep.subr.bf16.mxu0 0
      %2130 = vmatpush1.bf16.msra.mxu0 0
      %2131 = vmatprep.subr.bf16.mxu0 0
      %2132 = vmatpush1.bf16.msra.mxu0 0
      %2133 = vmatprep.subr.bf16.mxu0 0
      %2134 = vmatpush1.bf16.msra.mxu0 0
      %2135 = vmatprep.subr.bf16.mxu0 0
      %2136 = vmatpush1.bf16.msra.mxu0 0
      %2137 = vmatprep.subr.bf16.mxu0 0
      %2138 = vmatpush1.bf16.msra.mxu0 0
      %2139 = vmatprep.subr.bf16.mxu0 0
      %2140 = vmatpush1.bf16.msra.mxu0 0
      %2141 = vmatprep.subr.bf16.mxu0 0
      %2142 = vmatpush1.bf16.msra.mxu0 0
      %2143 = vmatprep.subr.bf16.mxu0 0
      %2144 = vmatpush1.bf16.msra.mxu0 0
      %2145 = vmatprep.subr.bf16.mxu0 0
      %2146 = vmatpush1.bf16.msra.mxu0 0
      %2147 = vmatprep.subr.bf16.mxu0 0
      %2148 = vmatpush1.bf16.msra.mxu0 0
      %2149 = vmatprep.subr.bf16.mxu0 0
      %2150 = vmatpush1.bf16.msra.mxu0 0
      %2151 = vmatprep.subr.bf16.mxu0 0
      %2152 = vmatpush1.bf16.msra.mxu0 0
      %2153 = vmatprep.subr.bf16.mxu0 0
      %2154 = vmatpush1.bf16.msra.mxu0 0
      %2155 = vmatprep.mubr.bf16.mxu0 0
      %2156 = vmatmul.mubr.bf16.gmra.mrb[0].mxu0 %v2121
      %v2157 = vpop.f32.mrb[0].mxu0
      %v2158 = vadd.f32 %v2118, %v2157
      %v2159 = vpop.f32.mrb[0].mxu0
      %v2160 = vadd.f32 %v2118, %v2159
      %v2161 = vpop.f32.mrb[0].mxu0
      %v2162 = vpop.f32.mrb[0].mxu0
      %2163 = vdwg.mxu0
      %v2164 = vxor.u32 %v2158, 2147483648
      %v2165 = vxor.u32 %v2160, 2147483648
      %v2166 = vmul.f32 %v2164, 1.442695
      %v2167 = vpow.pop %v2166
      %v2168 = vmul.f32 %v2165, 1.442695
      %v2169 = vpow.pop %v2168
      %v2170 = vadd.f32 %v2167, 1.0
      %v2171 = vadd.f32 %v2169, 1.0
      %v2172 = vrcp.pop %v2170
      %v2173 = vmul.f32 1.0, %v2172
      %v2174 = vrcp.pop %v2171
      %v2175 = vmul.f32 1.0, %v2174
      %v2178 = vcombine.low %v2173, %v2175
      %v2180 = vunpack.c.l.s4 1983009808
      %v2181 = vunpack.c.0.s8 %v2180
      %v2182 = vlaneseq
      %v2183 = vshrl.u32 %v2182, 7
      %v2184 = vsub.s32 %v2181, %v2183
      %v2185 = vrot.slane %v2178, %v2184
      %2187 = vst [vmem:[%s667] sm:$0xf] %v2185
      %p2188 = scmp.lt.s32.totalorder %s33, 1
      %s2189 = scalar_select %p2188, %s33, 1
      %s2190 = smul.addr %s2189, 4
      %s2191 = scalar_lea.vmem %s20, %s2190
      %p2192 = scmp.lt.s32.totalorder %s33, 1
      %s2193 = scalar_select %p2192, %s33, 1
      %s2194 = smul.addr %s2193, 2
      %s2195 = smul.addr %s2194, 2
      %s2196 = scalar_lea.vmem %s21, %s2195
      // Predicated region
      $region101: #{dcan_forward.1} parent=99 // pred_check
        %p2197 = pneg %p476
      $region102: #{dcan_forward.1} parent=99 // pred_check_branch
        %2199 = sbr.rel (%p2197) target = $region104
      $region103: #{dcan_forward.1} parent=99 // pred_region
        _
      $region104: #{dcan_forward.1} parent=99 // pred_fallthru
        _
      // Predicated region
      $region105: #{dcan_forward.1} parent=99 // pred_check
        %p2200 = pneg %p502
      $region106: #{dcan_forward.1} parent=99 // pred_check_branch
        %2202 = sbr.rel (%p2200) target = $region108
      $region107: #{dcan_forward.1} parent=99 // pred_region
        _
      $region108: #{dcan_forward.1} parent=99 // pred_fallthru
        _
    $region100: #{dcan_forward.1} parent=5 // pred_fallthru
      _
    %p2203 = scmp.le.s32.totalorder 2, %s28
    // Predicated region
    $region109: #{dcan_forward.1} parent=5 // pred_check
      %p2204 = pneg %p2203
    $region110: #{dcan_forward.1} parent=5 // pred_check_branch
      %2206 = sbr.rel (%p2204) target = $region112
    $region111: #{dcan_forward.1} parent=5 // pred_region
      %s2207 = ssub.s32 %s28, 2
      // Predicated region
      $region113: #{dcan_forward.1} parent=111 // pred_check
        %p2208 = pneg %p482
      $region114: #{dcan_forward.1} parent=111 // pred_check_branch
        %2210 = sbr.rel (%p2208) target = $region116
      $region115: #{dcan_forward.1} parent=111 // pred_region
        %p2211 = scmp.lt.s32.totalorder %s34, 1
        %s2212 = scalar_select %p2211, %s34, 1
        %s2213 = smul.addr %s2212, 4
        %s2214 = scalar_lea.vmem %s20, %s2213
      $region116: #{dcan_forward.1} parent=111 // pred_fallthru
        _
      // Predicated region
      $region117: #{dcan_forward.1} parent=111 // pred_check
        %p2215 = pneg %p508
      $region118: #{dcan_forward.1} parent=111 // pred_check_branch
        %2217 = sbr.rel (%p2215) target = $region120
      $region119: #{dcan_forward.1} parent=111 // pred_region
        %p2218 = scmp.lt.s32.totalorder %s34, 1
        %s2219 = scalar_select %p2218, %s34, 1
        %s2220 = smul.addr %s2219, 2
        %s2221 = smul.addr %s2220, 2
        %s2222 = scalar_lea.vmem %s21, %s2221
      $region120: #{dcan_forward.1} parent=111 // pred_fallthru
        _
    $region112: #{dcan_forward.1} parent=5 // pred_fallthru
      _
  $region6: #{dcan_forward.1} parent=0 // loop_footer
    %s32 = sadd.s32 1, %s28
  $region7: #{dcan_forward.1} parent=0 // loop_footer_branch
    %27 = sbr.rel target = $region3
  $region8: #{dcan_forward.1} parent=0 // loop_exit
    _

</llo_original>
